<compile_context>
chip_gen: v7x
topology: tpu7x:2x2x1
jax: 0.10.0
libtpu: 0.0.40
codegen_flags: <defaults>
</compile_context>

<pallas_src>
import math
import jax
import jax.numpy as jnp
from jax import lax
from jax.experimental import pallas as pl
from jax.experimental.pallas import tpu as pltpu

# ---- small synthetic config (BERT-like) ------------------------------------
B, S, H, NH, F = 2, 8, 32, 4, 64          # batch, seq, hidden, heads, ffn
HD = H // NH                               # head dim
VOCAB, MAXPOS, NLAYERS = 100, 16, 2
LN_EPS = 1e-12                             # BERT LayerNorm eps


def _mm(a, w_bf16):
    """MXU matmul: bf16 operands (weights pre-cast on host), f32 accumulation."""
    return jnp.dot(a.astype(jnp.bfloat16), w_bf16,
                   preferred_element_type=jnp.float32)


def _layer_norm(v, g, b):
    mu = jnp.mean(v, axis=-1, keepdims=True)
    var = jnp.mean((v - mu) ** 2, axis=-1, keepdims=True)
    return (v - mu) * lax.rsqrt(var + LN_EPS) * g + b


def _gelu(v):
    # tanh-approximate GELU (EUP-friendly; exact-erf GELU differs <1e-3)
    return 0.5 * v * (1.0 + jnp.tanh(
        0.7978845608028654 * (v + 0.044715 * v * v * v)))


def _heads(mat2d):
    """(S, H) -> head-major (NH, S, HD) bf16 operands for batched MXU ops."""
    return jnp.stack(
        [mat2d[:, h * HD:(h + 1) * HD] for h in range(NH)]
    ).astype(jnp.bfloat16)


# ---- Pallas kernel: one (batch element, layer) grid step --------------------
def encoder_layer_kernel(x_ref,
                         wqkv_ref, bqkv_ref, wo_ref, bo_ref,
                         g1_ref, be1_ref, w1_ref, b1_ref,
                         w2_ref, b2_ref, g2_ref, be2_ref,
                         o_ref, x_scr):
    f32 = jnp.float32
    layer = pl.program_id(1)

    # Load this sequence's embeddings into the layer-carried VMEM accumulator.
    # (x block is re-fetched per layer step by the pipeline; it is tiny and
    #  only consumed here.)
    @pl.when(layer == 0)
    def _():
        x_scr[...] = x_ref[0].astype(f32)                 # (S, H)

    x = x_scr[...]                                        # (S, H) f32

    # --- fused QKV projection: one (S, H) @ (H, 3H) MXU op ---
    # (1/sqrt(HD) is already folded into the Q columns of wqkv/bqkv.)
    qkv = _mm(x, wqkv_ref[0]) + bqkv_ref[0]               # (S, 3H) f32
    q3 = _heads(qkv[:, 0:H])                              # (NH, S, HD) bf16
    k3 = _heads(qkv[:, H:2 * H])
    v3 = _heads(qkv[:, 2 * H:3 * H])

    # --- multi-head self-attention: ONE batched contraction per stage ---
    # Each grid step is exactly one sequence, so no batch/padding mask needed.
    s = jnp.einsum('hqd,hkd->hqk', q3, k3,
                   preferred_element_type=f32)            # (NH, S, S)
    s = s - jnp.max(s, axis=-1, keepdims=True)            # stable softmax
    p = jnp.exp(s)
    p = p * pl.reciprocal(jnp.sum(p, axis=-1, keepdims=True), approx=True)
    ctx3 = jnp.einsum('hqk,hkd->hqd', p.astype(jnp.bfloat16), v3,
                      preferred_element_type=f32)         # (NH, S, HD)

    # --- attention output projection (head-major Wo) + residual + LN ---
    attn_out = jnp.einsum('hsd,hde->hse', ctx3.astype(jnp.bfloat16), wo_ref[0],
                          preferred_element_type=f32).sum(axis=0) + bo_ref[0]
    x1 = _layer_norm(x + attn_out, g1_ref[0], be1_ref[0])

    # --- feed-forward + residual + LN ---
    hmid = _gelu(_mm(x1, w1_ref[0]) + b1_ref[0])          # (S, F)
    ffn_out = _mm(hmid, w2_ref[0]) + b2_ref[0]            # (S, H)
    x_new = _layer_norm(x1 + ffn_out, g2_ref[0], be2_ref[0])
    x_scr[...] = x_new                                    # carry to next layer

    # Only the CLS row leaves the kernel, written once on the last layer.
    @pl.when(layer == pl.num_programs(1) - 1)
    def _():
        o_ref[0] = x_new[0:1, :].astype(o_ref.dtype)


_PARAM_NAMES = ("wqkv", "bqkv", "wo", "bo", "g1", "be1",
                "w1", "b1", "w2", "b2", "g2", "be2")


def _stacked_layer_spec(arr):
    """Stream one layer of an (NLAYERS, ...)-stacked param per grid step."""
    nd = arr.ndim
    return pl.BlockSpec((1,) + arr.shape[1:],
                        lambda b, l: (l,) + (0,) * (nd - 1))


def encoder_cls(x, params):
    """Whole encoder stack as one pallas_call over a (batch, layer) grid."""
    weights = [params[n] for n in _PARAM_NAMES]
    in_specs = [pl.BlockSpec((1, S, H), lambda b, l: (b, 0, 0))]
    in_specs += [_stacked_layer_spec(w) for w in weights]
    out = pl.pallas_call(
        encoder_layer_kernel,
        out_shape=jax.ShapeDtypeStruct((B, 1, H), jnp.float32),
        grid_spec=pltpu.PrefetchScalarGridSpec(
            num_scalar_prefetch=0,
            grid=(B, NLAYERS),
            in_specs=in_specs,
            out_specs=pl.BlockSpec((1, 1, H), lambda b, l: (b, 0, 0)),
            scratch_shapes=[pltpu.VMEM((S, H), jnp.float32)],
        ),
        compiler_params=pltpu.CompilerParams(
            dimension_semantics=("parallel", "arbitrary")),
    )(x, *weights)
    return out.reshape(B, H)


# ---- deterministic synthetic parameters (stacked over layers) ---------------
def init_params(key):
    keys = iter(jax.random.split(key, 64))

    def nrm(shape, std=0.02):
        return jax.random.normal(next(keys), shape, jnp.float32) * std

    L = NLAYERS
    scale = 1.0 / math.sqrt(HD)

    # Fused Wq|Wk|Wv with 1/sqrt(HD) folded into the Q columns (init-time fold,
    # zero runtime cost); matmul weights stored bf16 (halves weight DMA bytes).
    wqkv = nrm((L, H, 3 * H)).at[:, :, 0:H].multiply(scale)
    bqkv = jnp.zeros((L, 1, 3 * H), jnp.float32).at[:, :, 0:H].multiply(scale)
    wo = nrm((L, H, H)).reshape(L, NH, HD, H)   # head-major rows for batched use

    return {
        "tok_emb": nrm((VOCAB, H)),
        "pos_emb": nrm((MAXPOS, H)),
        "emb_gamma": jnp.ones((H,), jnp.float32),
        "emb_beta": jnp.zeros((H,), jnp.float32),
        "wqkv": wqkv.astype(jnp.bfloat16),
        "bqkv": bqkv,
        "wo": wo.astype(jnp.bfloat16),
        "bo": jnp.zeros((L, 1, H), jnp.float32),
        "g1": jnp.ones((L, 1, H), jnp.float32),
        "be1": jnp.zeros((L, 1, H), jnp.float32),
        "w1": nrm((L, H, F)).astype(jnp.bfloat16),
        "b1": jnp.zeros((L, 1, F), jnp.float32),
        "w2": nrm((L, F, H)).astype(jnp.bfloat16),
        "b2": jnp.zeros((L, 1, H), jnp.float32),
        "g2": jnp.ones((L, 1, H), jnp.float32),
        "be2": jnp.zeros((L, 1, H), jnp.float32),
    }


# ---- full forward: embeddings (glue, plain JAX) + fused Pallas encoder ------
def mrag_retriever_forward(token_ids, params):
    # token + position embeddings, embedding LayerNorm (glue in plain JAX)
    x = params["tok_emb"][token_ids] + params["pos_emb"][:S][None, :, :]
    mu = x.mean(-1, keepdims=True)
    var = ((x - mu) ** 2).mean(-1, keepdims=True)
    x = ((x - mu) / jnp.sqrt(var + LN_EPS)
         * params["emb_gamma"] + params["emb_beta"]).astype(jnp.float32)

    # outputs.last_hidden_state[:, 0, :] -> CLS embedding (computed in-kernel)
    return encoder_cls(x, params)


if __name__ == "__main__":
    key = jax.random.PRNGKey(0)
    k_tok, k_par = jax.random.split(key)

    # synthetic "tokenized texts": int32 token ids, batch of 2 texts, seq 8
    token_ids = jax.random.randint(k_tok, (B, S), 0, VOCAB, dtype=jnp.int32)
    params = init_params(k_par)

    cls_emb = mrag_retriever_forward(token_ids, params)   # (B, H)
    jax.block_until_ready(cls_emb)
    assert cls_emb.shape == (B, H)
    print("KERNEL_OK")
</pallas_src>

<mosaic_0001>
module attributes {stable_mosaic.version = 11 : i64} {
  func.func @encoder_layer_kernel(%arg0: i32, %arg1: i32, %arg2: memref<1x8x32xf32, #tpu.memory_space<vmem>>, %arg3: memref<1x32x96xbf16, #tpu.memory_space<vmem>>, %arg4: memref<1x1x96xf32, #tpu.memory_space<vmem>>, %arg5: memref<1x4x8x32xbf16, #tpu.memory_space<vmem>>, %arg6: memref<1x1x32xf32, #tpu.memory_space<vmem>>, %arg7: memref<1x1x32xf32, #tpu.memory_space<vmem>>, %arg8: memref<1x1x32xf32, #tpu.memory_space<vmem>>, %arg9: memref<1x32x64xbf16, #tpu.memory_space<vmem>>, %arg10: memref<1x1x64xf32, #tpu.memory_space<vmem>>, %arg11: memref<1x64x32xbf16, #tpu.memory_space<vmem>>, %arg12: memref<1x1x32xf32, #tpu.memory_space<vmem>>, %arg13: memref<1x1x32xf32, #tpu.memory_space<vmem>>, %arg14: memref<1x1x32xf32, #tpu.memory_space<vmem>>, %arg15: memref<1x1x32xf32, #tpu.memory_space<vmem>>, %arg16: memref<8x32xf32, #tpu.memory_space<vmem>>) attributes {dimension_semantics = [#tpu.dimension_semantics<parallel>, #tpu.dimension_semantics<arbitrary>], iteration_bounds = array<i64: 2, 2>, scalar_prefetch = 0 : i64, scratch_operands = 1 : i64, tpu.core_type = #tpu.core_type<tc>, window_params = [{transform_indices = @transform_0, window_bounds = array<i64: 1, 8, 32>}, {transform_indices = @transform_1, window_bounds = array<i64: 1, 32, 96>}, {transform_indices = @transform_2, window_bounds = array<i64: 1, 1, 96>}, {transform_indices = @transform_3, window_bounds = array<i64: 1, 4, 8, 32>}, {transform_indices = @transform_4, window_bounds = array<i64: 1, 1, 32>}, {transform_indices = @transform_5, window_bounds = array<i64: 1, 1, 32>}, {transform_indices = @transform_6, window_bounds = array<i64: 1, 1, 32>}, {transform_indices = @transform_7, window_bounds = array<i64: 1, 32, 64>}, {transform_indices = @transform_8, window_bounds = array<i64: 1, 1, 64>}, {transform_indices = @transform_9, window_bounds = array<i64: 1, 64, 32>}, {transform_indices = @transform_10, window_bounds = array<i64: 1, 1, 32>}, {transform_indices = @transform_11, window_bounds = array<i64: 1, 1, 32>}, {transform_indices = @transform_12, window_bounds = array<i64: 1, 1, 32>}, {transform_indices = @transform_13, window_bounds = array<i64: 1, 1, 32>}]} {
    %c0_i32 = arith.constant 0 : i32
    %0 = arith.cmpi eq, %arg1, %c0_i32 : i32
    %1 = arith.extui %0 : i1 to i32
    %c0_i32_0 = arith.constant 0 : i32
    %2 = arith.cmpi ne, %1, %c0_i32_0 : i32
    scf.if %2 {
      %c0_64 = arith.constant 0 : index
      %c0_65 = arith.constant 0 : index
      %c0_66 = arith.constant 0 : index
      %154 = vector.load %arg2[%c0_64, %c0_65, %c0_66] : memref<1x8x32xf32, #tpu.memory_space<vmem>>, vector<1x8x32xf32>
      %155 = vector.shape_cast %154 : vector<1x8x32xf32> to vector<8x32xf32>
      %c0_67 = arith.constant 0 : index
      %c0_68 = arith.constant 0 : index
      %156 = vector.load %arg16[%c0_67, %c0_68] : memref<8x32xf32, #tpu.memory_space<vmem>>, vector<8x32xf32>
      tpu.vector_store %arg16[%c0_67, %c0_68], %155 {strides = array<i32>} : memref<8x32xf32, #tpu.memory_space<vmem>>, vector<8x32xf32>,
    } else {
    }
    %c0 = arith.constant 0 : index
    %c0_1 = arith.constant 0 : index
    %3 = vector.load %arg16[%c0, %c0_1] : memref<8x32xf32, #tpu.memory_space<vmem>>, vector<8x32xf32>
    %c0_2 = arith.constant 0 : index
    %c0_3 = arith.constant 0 : index
    %c0_4 = arith.constant 0 : index
    %4 = vector.load %arg3[%c0_2, %c0_3, %c0_4] : memref<1x32x96xbf16, #tpu.memory_space<vmem>>, vector<1x32x96xbf16>
    %5 = vector.shape_cast %4 : vector<1x32x96xbf16> to vector<32x96xbf16>
    %6 = arith.truncf %3 : vector<8x32xf32> to vector<8x32xbf16>
    %cst = arith.constant dense<0.000000e+00> : vector<8x96xf32>
    %7 = tpu.matmul %6, %5, %cst {dimension_numbers = #tpu.dot_dimension_numbers<[1], [0], [0], [1], [0, 0, 1, 1], [], []>} : vector<8x32xbf16>, vector<32x96xbf16>, vector<8x96xf32> -> vector<8x96xf32>
    %c0_5 = arith.constant 0 : index
    %c0_6 = arith.constant 0 : index
    %c0_7 = arith.constant 0 : index
    %8 = vector.load %arg4[%c0_5, %c0_6, %c0_7] : memref<1x1x96xf32, #tpu.memory_space<vmem>>, vector<1x1x96xf32>
    %9 = vector.shape_cast %8 : vector<1x1x96xf32> to vector<1x96xf32>
    %10 = vector.broadcast %9 : vector<1x96xf32> to vector<8x96xf32>
    %11 = arith.addf %7, %10 : vector<8x96xf32>
    %12 = vector.extract_strided_slice %11 {offsets = [0, 0], sizes = [8, 32], strides = [1, 1]} : vector<8x96xf32> to vector<8x32xf32>
    %13 = vector.extract_strided_slice %12 {offsets = [0, 0], sizes = [8, 8], strides = [1, 1]} : vector<8x32xf32> to vector<8x8xf32>
    %14 = vector.extract_strided_slice %12 {offsets = [0, 8], sizes = [8, 8], strides = [1, 1]} : vector<8x32xf32> to vector<8x8xf32>
    %15 = vector.extract_strided_slice %12 {offsets = [0, 16], sizes = [8, 8], strides = [1, 1]} : vector<8x32xf32> to vector<8x8xf32>
    %16 = vector.extract_strided_slice %12 {offsets = [0, 24], sizes = [8, 8], strides = [1, 1]} : vector<8x32xf32> to vector<8x8xf32>
    %17 = vector.shape_cast %13 : vector<8x8xf32> to vector<1x8x8xf32>
    %18 = vector.shape_cast %14 : vector<8x8xf32> to vector<1x8x8xf32>
    %19 = vector.shape_cast %15 : vector<8x8xf32> to vector<1x8x8xf32>
    %20 = vector.shape_cast %16 : vector<8x8xf32> to vector<1x8x8xf32>
    %21 = tpu.concatenate %17, %18, %19, %20 in 0 : vector<1x8x8xf32>, vector<1x8x8xf32>, vector<1x8x8xf32>, vector<1x8x8xf32> -> vector<4x8x8xf32>
    %22 = arith.truncf %21 : vector<4x8x8xf32> to vector<4x8x8xbf16>
    %23 = vector.extract_strided_slice %11 {offsets = [0, 32], sizes = [8, 32], strides = [1, 1]} : vector<8x96xf32> to vector<8x32xf32>
    %24 = vector.extract_strided_slice %23 {offsets = [0, 0], sizes = [8, 8], strides = [1, 1]} : vector<8x32xf32> to vector<8x8xf32>
    %25 = vector.extract_strided_slice %23 {offsets = [0, 8], sizes = [8, 8], strides = [1, 1]} : vector<8x32xf32> to vector<8x8xf32>
    %26 = vector.extract_strided_slice %23 {offsets = [0, 16], sizes = [8, 8], strides = [1, 1]} : vector<8x32xf32> to vector<8x8xf32>
    %27 = vector.extract_strided_slice %23 {offsets = [0, 24], sizes = [8, 8], strides = [1, 1]} : vector<8x32xf32> to vector<8x8xf32>
    %28 = vector.shape_cast %24 : vector<8x8xf32> to vector<1x8x8xf32>
    %29 = vector.shape_cast %25 : vector<8x8xf32> to vector<1x8x8xf32>
    %30 = vector.shape_cast %26 : vector<8x8xf32> to vector<1x8x8xf32>
    %31 = vector.shape_cast %27 : vector<8x8xf32> to vector<1x8x8xf32>
    %32 = tpu.concatenate %28, %29, %30, %31 in 0 : vector<1x8x8xf32>, vector<1x8x8xf32>, vector<1x8x8xf32>, vector<1x8x8xf32> -> vector<4x8x8xf32>
    %33 = arith.truncf %32 : vector<4x8x8xf32> to vector<4x8x8xbf16>
    %34 = vector.extract_strided_slice %11 {offsets = [0, 64], sizes = [8, 32], strides = [1, 1]} : vector<8x96xf32> to vector<8x32xf32>
    %35 = vector.extract_strided_slice %34 {offsets = [0, 0], sizes = [8, 8], strides = [1, 1]} : vector<8x32xf32> to vector<8x8xf32>
    %36 = vector.extract_strided_slice %34 {offsets = [0, 8], sizes = [8, 8], strides = [1, 1]} : vector<8x32xf32> to vector<8x8xf32>
    %37 = vector.extract_strided_slice %34 {offsets = [0, 16], sizes = [8, 8], strides = [1, 1]} : vector<8x32xf32> to vector<8x8xf32>
    %38 = vector.extract_strided_slice %34 {offsets = [0, 24], sizes = [8, 8], strides = [1, 1]} : vector<8x32xf32> to vector<8x8xf32>
    %39 = vector.shape_cast %35 : vector<8x8xf32> to vector<1x8x8xf32>
    %40 = vector.shape_cast %36 : vector<8x8xf32> to vector<1x8x8xf32>
    %41 = vector.shape_cast %37 : vector<8x8xf32> to vector<1x8x8xf32>
    %42 = vector.shape_cast %38 : vector<8x8xf32> to vector<1x8x8xf32>
    %43 = tpu.concatenate %39, %40, %41, %42 in 0 : vector<1x8x8xf32>, vector<1x8x8xf32>, vector<1x8x8xf32>, vector<1x8x8xf32> -> vector<4x8x8xf32>
    %44 = arith.truncf %43 : vector<4x8x8xf32> to vector<4x8x8xbf16>
    "tpu.trace_start"() <{level = 10 : i32, message = "hqd,hkd->hqk"}> : () -> ()
    %cst_8 = arith.constant dense<0.000000e+00> : vector<4x8x8xf32>
    %45 = tpu.matmul %22, %33, %cst_8 {dimension_numbers = #tpu.dot_dimension_numbers<[2], [2], [1], [1], [0, 0, 0, 1, 1, 1], [0], [0]>} : vector<4x8x8xbf16>, vector<4x8x8xbf16>, vector<4x8x8xf32> -> vector<4x8x8xf32>
    "tpu.trace_stop"() : () -> ()
    %cst_9 = arith.constant dense<0xFF800000> : vector<4x8xf32>
    %46 = vector.multi_reduction <maximumf>, %45, %cst_9 [2] : vector<4x8x8xf32> to vector<4x8xf32>
    %47 = vector.shape_cast %46 : vector<4x8xf32> to vector<4x8x1xf32>
    %48 = vector.broadcast %47 : vector<4x8x1xf32> to vector<4x8x8xf32>
    %49 = arith.subf %45, %48 : vector<4x8x8xf32>
    %50 = math.exp %49 : vector<4x8x8xf32>
    %cst_10 = arith.constant dense<0.000000e+00> : vector<4x8xf32>
    %51 = vector.multi_reduction <add>, %50, %cst_10 [2] : vector<4x8x8xf32> to vector<4x8xf32>
    %52 = vector.shape_cast %51 : vector<4x8xf32> to vector<4x8x1xf32>
    %53 = tpu.reciprocal %52 {approx = true} : vector<4x8x1xf32> -> vector<4x8x1xf32>
    %54 = vector.broadcast %53 : vector<4x8x1xf32> to vector<4x8x8xf32>
    %55 = arith.mulf %50, %54 : vector<4x8x8xf32>
    %56 = arith.truncf %55 : vector<4x8x8xf32> to vector<4x8x8xbf16>
    "tpu.trace_start"() <{level = 10 : i32, message = "hqk,hkd->hqd"}> : () -> ()
    %cst_11 = arith.constant dense<0.000000e+00> : vector<4x8x8xf32>
    %57 = tpu.matmul %56, %44, %cst_11 {dimension_numbers = #tpu.dot_dimension_numbers<[2], [1], [1], [2], [0, 0, 0, 1, 1, 2], [0], [0]>} : vector<4x8x8xbf16>, vector<4x8x8xbf16>, vector<4x8x8xf32> -> vector<4x8x8xf32>
    "tpu.trace_stop"() : () -> ()
    %58 = arith.truncf %57 : vector<4x8x8xf32> to vector<4x8x8xbf16>
    %c0_12 = arith.constant 0 : index
    %c0_13 = arith.constant 0 : index
    %c0_14 = arith.constant 0 : index
    %c0_15 = arith.constant 0 : index
    %59 = vector.load %arg5[%c0_12, %c0_13, %c0_14, %c0_15] : memref<1x4x8x32xbf16, #tpu.memory_space<vmem>>, vector<1x4x8x32xbf16>
    %60 = vector.shape_cast %59 : vector<1x4x8x32xbf16> to vector<4x8x32xbf16>
    "tpu.trace_start"() <{level = 10 : i32, message = "hsd,hde->hse"}> : () -> ()
    %cst_16 = arith.constant dense<0.000000e+00> : vector<4x8x32xf32>
    %61 = tpu.matmul %58, %60, %cst_16 {dimension_numbers = #tpu.dot_dimension_numbers<[2], [1], [1], [2], [0, 0, 0, 1, 1, 2], [0], [0]>} : vector<4x8x8xbf16>, vector<4x8x32xbf16>, vector<4x8x32xf32> -> vector<4x8x32xf32>
    "tpu.trace_stop"() : () -> ()
    %cst_17 = arith.constant dense<0.000000e+00> : vector<8x32xf32>
    %62 = vector.multi_reduction <add>, %61, %cst_17 [0] : vector<4x8x32xf32> to vector<8x32xf32>
    %c0_18 = arith.constant 0 : index
    %c0_19 = arith.constant 0 : index
    %c0_20 = arith.constant 0 : index
    %63 = vector.load %arg6[%c0_18, %c0_19, %c0_20] : memref<1x1x32xf32, #tpu.memory_space<vmem>>, vector<1x1x32xf32>
    %64 = vector.shape_cast %63 : vector<1x1x32xf32> to vector<1x32xf32>
    %65 = vector.broadcast %64 : vector<1x32xf32> to vector<8x32xf32>
    %66 = arith.addf %62, %65 : vector<8x32xf32>
    %67 = arith.addf %3, %66 : vector<8x32xf32>
    %c0_21 = arith.constant 0 : index
    %c0_22 = arith.constant 0 : index
    %c0_23 = arith.constant 0 : index
    %68 = vector.load %arg7[%c0_21, %c0_22, %c0_23] : memref<1x1x32xf32, #tpu.memory_space<vmem>>, vector<1x1x32xf32>
    %69 = vector.shape_cast %68 : vector<1x1x32xf32> to vector<1x32xf32>
    %c0_24 = arith.constant 0 : index
    %c0_25 = arith.constant 0 : index
    %c0_26 = arith.constant 0 : index
    %70 = vector.load %arg8[%c0_24, %c0_25, %c0_26] : memref<1x1x32xf32, #tpu.memory_space<vmem>>, vector<1x1x32xf32>
    %71 = vector.shape_cast %70 : vector<1x1x32xf32> to vector<1x32xf32>
    %cst_27 = arith.constant dense<0.000000e+00> : vector<8xf32>
    %72 = vector.multi_reduction <add>, %67, %cst_27 [1] : vector<8x32xf32> to vector<8xf32>
    %73 = vector.shape_cast %72 : vector<8xf32> to vector<8x1xf32>
    %cst_28 = arith.constant 3.200000e+01 : f32
    %74 = vector.broadcast %cst_28 : f32 to vector<8x1xf32>
    %75 = arith.divf %73, %74 : vector<8x1xf32>
    %76 = vector.broadcast %75 : vector<8x1xf32> to vector<8x32xf32>
    %77 = arith.subf %67, %76 : vector<8x32xf32>
    %78 = arith.mulf %77, %77 : vector<8x32xf32>
    %cst_29 = arith.constant dense<0.000000e+00> : vector<8xf32>
    %79 = vector.multi_reduction <add>, %78, %cst_29 [1] : vector<8x32xf32> to vector<8xf32>
    %80 = vector.shape_cast %79 : vector<8xf32> to vector<8x1xf32>
    %cst_30 = arith.constant 3.200000e+01 : f32
    %81 = vector.broadcast %cst_30 : f32 to vector<8x1xf32>
    %82 = arith.divf %80, %81 : vector<8x1xf32>
    %83 = vector.broadcast %75 : vector<8x1xf32> to vector<8x32xf32>
    %84 = arith.subf %67, %83 : vector<8x32xf32>
    %cst_31 = arith.constant 9.99999996E-13 : f32
    %85 = vector.broadcast %cst_31 : f32 to vector<8x1xf32>
    %86 = arith.addf %82, %85 : vector<8x1xf32>
    %87 = math.rsqrt %86 : vector<8x1xf32>
    %88 = vector.broadcast %87 : vector<8x1xf32> to vector<8x32xf32>
    %89 = arith.mulf %84, %88 : vector<8x32xf32>
    %90 = vector.broadcast %69 : vector<1x32xf32> to vector<8x32xf32>
    %91 = arith.mulf %89, %90 : vector<8x32xf32>
    %92 = vector.broadcast %71 : vector<1x32xf32> to vector<8x32xf32>
    %93 = arith.addf %91, %92 : vector<8x32xf32>
    %c0_32 = arith.constant 0 : index
    %c0_33 = arith.constant 0 : index
    %c0_34 = arith.constant 0 : index
    %94 = vector.load %arg9[%c0_32, %c0_33, %c0_34] : memref<1x32x64xbf16, #tpu.memory_space<vmem>>, vector<1x32x64xbf16>
    %95 = vector.shape_cast %94 : vector<1x32x64xbf16> to vector<32x64xbf16>
    %96 = arith.truncf %93 : vector<8x32xf32> to vector<8x32xbf16>
    %cst_35 = arith.constant dense<0.000000e+00> : vector<8x64xf32>
    %97 = tpu.matmul %96, %95, %cst_35 {dimension_numbers = #tpu.dot_dimension_numbers<[1], [0], [0], [1], [0, 0, 1, 1], [], []>} : vector<8x32xbf16>, vector<32x64xbf16>, vector<8x64xf32> -> vector<8x64xf32>
    %c0_36 = arith.constant 0 : index
    %c0_37 = arith.constant 0 : index
    %c0_38 = arith.constant 0 : index
    %98 = vector.load %arg10[%c0_36, %c0_37, %c0_38] : memref<1x1x64xf32, #tpu.memory_space<vmem>>, vector<1x1x64xf32>
    %99 = vector.shape_cast %98 : vector<1x1x64xf32> to vector<1x64xf32>
    %100 = vector.broadcast %99 : vector<1x64xf32> to vector<8x64xf32>
    %101 = arith.addf %97, %100 : vector<8x64xf32>
    %cst_39 = arith.constant 5.000000e-01 : f32
    %102 = vector.broadcast %cst_39 : f32 to vector<8x64xf32>
    %103 = arith.mulf %102, %101 : vector<8x64xf32>
    %cst_40 = arith.constant 4.471500e-02 : f32
    %104 = vector.broadcast %cst_40 : f32 to vector<8x64xf32>
    %105 = arith.mulf %104, %101 : vector<8x64xf32>
    %106 = arith.mulf %105, %101 : vector<8x64xf32>
    %107 = arith.mulf %106, %101 : vector<8x64xf32>
    %108 = arith.addf %101, %107 : vector<8x64xf32>
    %cst_41 = arith.constant 0.797884583 : f32
    %109 = vector.broadcast %cst_41 : f32 to vector<8x64xf32>
    %110 = arith.mulf %109, %108 : vector<8x64xf32>
    %111 = math.tanh %110 : vector<8x64xf32>
    %cst_42 = arith.constant 1.000000e+00 : f32
    %112 = vector.broadcast %cst_42 : f32 to vector<8x64xf32>
    %113 = arith.addf %112, %111 : vector<8x64xf32>
    %114 = arith.mulf %103, %113 : vector<8x64xf32>
    %c0_43 = arith.constant 0 : index
    %c0_44 = arith.constant 0 : index
    %c0_45 = arith.constant 0 : index
    %115 = vector.load %arg11[%c0_43, %c0_44, %c0_45] : memref<1x64x32xbf16, #tpu.memory_space<vmem>>, vector<1x64x32xbf16>
    %116 = vector.shape_cast %115 : vector<1x64x32xbf16> to vector<64x32xbf16>
    %117 = arith.truncf %114 : vector<8x64xf32> to vector<8x64xbf16>
    %cst_46 = arith.constant dense<0.000000e+00> : vector<8x32xf32>
    %118 = tpu.matmul %117, %116, %cst_46 {dimension_numbers = #tpu.dot_dimension_numbers<[1], [0], [0], [1], [0, 0, 1, 1], [], []>} : vector<8x64xbf16>, vector<64x32xbf16>, vector<8x32xf32> -> vector<8x32xf32>
    %c0_47 = arith.constant 0 : index
    %c0_48 = arith.constant 0 : index
    %c0_49 = arith.constant 0 : index
    %119 = vector.load %arg12[%c0_47, %c0_48, %c0_49] : memref<1x1x32xf32, #tpu.memory_space<vmem>>, vector<1x1x32xf32>
    %120 = vector.shape_cast %119 : vector<1x1x32xf32> to vector<1x32xf32>
    %121 = vector.broadcast %120 : vector<1x32xf32> to vector<8x32xf32>
    %122 = arith.addf %118, %121 : vector<8x32xf32>
    %123 = arith.addf %93, %122 : vector<8x32xf32>
    %c0_50 = arith.constant 0 : index
    %c0_51 = arith.constant 0 : index
    %c0_52 = arith.constant 0 : index
    %124 = vector.load %arg13[%c0_50, %c0_51, %c0_52] : memref<1x1x32xf32, #tpu.memory_space<vmem>>, vector<1x1x32xf32>
    %125 = vector.shape_cast %124 : vector<1x1x32xf32> to vector<1x32xf32>
    %c0_53 = arith.constant 0 : index
    %c0_54 = arith.constant 0 : index
    %c0_55 = arith.constant 0 : index
    %126 = vector.load %arg14[%c0_53, %c0_54, %c0_55] : memref<1x1x32xf32, #tpu.memory_space<vmem>>, vector<1x1x32xf32>
    %127 = vector.shape_cast %126 : vector<1x1x32xf32> to vector<1x32xf32>
    %cst_56 = arith.constant dense<0.000000e+00> : vector<8xf32>
    %128 = vector.multi_reduction <add>, %123, %cst_56 [1] : vector<8x32xf32> to vector<8xf32>
    %129 = vector.shape_cast %128 : vector<8xf32> to vector<8x1xf32>
    %cst_57 = arith.constant 3.200000e+01 : f32
    %130 = vector.broadcast %cst_57 : f32 to vector<8x1xf32>
    %131 = arith.divf %129, %130 : vector<8x1xf32>
    %132 = vector.broadcast %131 : vector<8x1xf32> to vector<8x32xf32>
    %133 = arith.subf %123, %132 : vector<8x32xf32>
    %134 = arith.mulf %133, %133 : vector<8x32xf32>
    %cst_58 = arith.constant dense<0.000000e+00> : vector<8xf32>
    %135 = vector.multi_reduction <add>, %134, %cst_58 [1] : vector<8x32xf32> to vector<8xf32>
    %136 = vector.shape_cast %135 : vector<8xf32> to vector<8x1xf32>
    %cst_59 = arith.constant 3.200000e+01 : f32
    %137 = vector.broadcast %cst_59 : f32 to vector<8x1xf32>
    %138 = arith.divf %136, %137 : vector<8x1xf32>
    %139 = vector.broadcast %131 : vector<8x1xf32> to vector<8x32xf32>
    %140 = arith.subf %123, %139 : vector<8x32xf32>
    %cst_60 = arith.constant 9.99999996E-13 : f32
    %141 = vector.broadcast %cst_60 : f32 to vector<8x1xf32>
    %142 = arith.addf %138, %141 : vector<8x1xf32>
    %143 = math.rsqrt %142 : vector<8x1xf32>
    %144 = vector.broadcast %143 : vector<8x1xf32> to vector<8x32xf32>
    %145 = arith.mulf %140, %144 : vector<8x32xf32>
    %146 = vector.broadcast %125 : vector<1x32xf32> to vector<8x32xf32>
    %147 = arith.mulf %145, %146 : vector<8x32xf32>
    %148 = vector.broadcast %127 : vector<1x32xf32> to vector<8x32xf32>
    %149 = arith.addf %147, %148 : vector<8x32xf32>
    %c0_61 = arith.constant 0 : index
    %c0_62 = arith.constant 0 : index
    %150 = vector.load %arg16[%c0_61, %c0_62] : memref<8x32xf32, #tpu.memory_space<vmem>>, vector<8x32xf32>
    tpu.vector_store %arg16[%c0_61, %c0_62], %149 {strides = array<i32>} : memref<8x32xf32, #tpu.memory_space<vmem>>, vector<8x32xf32>,
    %c1_i32 = arith.constant 1 : i32
    %151 = arith.cmpi eq, %arg1, %c1_i32 : i32
    %152 = arith.extui %151 : i1 to i32
    %c0_i32_63 = arith.constant 0 : i32
    %153 = arith.cmpi ne, %152, %c0_i32_63 : i32
    scf.if %153 {
      %154 = vector.extract_strided_slice %149 {offsets = [0, 0], sizes = [1, 32], strides = [1, 1]} : vector<8x32xf32> to vector<1x32xf32>
      %c0_64 = arith.constant 0 : index
      %c0_65 = arith.constant 0 : index
      %c0_66 = arith.constant 0 : index
      %155 = vector.load %arg15[%c0_64, %c0_65, %c0_66] : memref<1x1x32xf32, #tpu.memory_space<vmem>>, vector<1x1x32xf32>
      %156 = vector.shape_cast %155 : vector<1x1x32xf32> to vector<1x32xf32>
      %157 = vector.shape_cast %154 : vector<1x32xf32> to vector<1x1x32xf32>
      tpu.vector_store %arg15[%c0_64, %c0_65, %c0_66], %157 {strides = array<i32>} : memref<1x1x32xf32, #tpu.memory_space<vmem>>, vector<1x1x32xf32>,
    } else {
    }
    return
  }
  func.func @transform_0(%arg0: i32, %arg1: i32) -> (i32, i32, i32) {
    %c0_i32 = arith.constant 0 : i32
    %c0_i32_0 = arith.constant 0 : i32
    %c0_i32_1 = arith.constant 0 : i32
    return %arg0, %c0_i32, %c0_i32_0 : i32, i32, i32
  }
  func.func @transform_1(%arg0: i32, %arg1: i32) -> (i32, i32, i32) {
    %c0_i32 = arith.constant 0 : i32
    %c0_i32_0 = arith.constant 0 : i32
    %c0_i32_1 = arith.constant 0 : i32
    return %arg1, %c0_i32, %c0_i32_0 : i32, i32, i32
  }
  func.func @transform_2(%arg0: i32, %arg1: i32) -> (i32, i32, i32) {
    %c0_i32 = arith.constant 0 : i32
    %c0_i32_0 = arith.constant 0 : i32
    %c0_i32_1 = arith.constant 0 : i32
    return %arg1, %c0_i32, %c0_i32_0 : i32, i32, i32
  }
  func.func @transform_3(%arg0: i32, %arg1: i32) -> (i32, i32, i32, i32) {
    %c0_i32 = arith.constant 0 : i32
    %c0_i32_0 = arith.constant 0 : i32
    %c0_i32_1 = arith.constant 0 : i32
    %c0_i32_2 = arith.constant 0 : i32
    return %arg1, %c0_i32, %c0_i32_0, %c0_i32_1 : i32, i32, i32, i32
  }
  func.func @transform_4(%arg0: i32, %arg1: i32) -> (i32, i32, i32) {
    %c0_i32 = arith.constant 0 : i32
    %c0_i32_0 = arith.constant 0 : i32
    %c0_i32_1 = arith.constant 0 : i32
    return %arg1, %c0_i32, %c0_i32_0 : i32, i32, i32
  }
  func.func @transform_5(%arg0: i32, %arg1: i32) -> (i32, i32, i32) {
    %c0_i32 = arith.constant 0 : i32
    %c0_i32_0 = arith.constant 0 : i32
    %c0_i32_1 = arith.constant 0 : i32
    return %arg1, %c0_i32, %c0_i32_0 : i32, i32, i32
  }
  func.func @transform_6(%arg0: i32, %arg1: i32) -> (i32, i32, i32) {
    %c0_i32 = arith.constant 0 : i32
    %c0_i32_0 = arith.constant 0 : i32
    %c0_i32_1 = arith.constant 0 : i32
    return %arg1, %c0_i32, %c0_i32_0 : i32, i32, i32
  }
  func.func @transform_7(%arg0: i32, %arg1: i32) -> (i32, i32, i32) {
    %c0_i32 = arith.constant 0 : i32
    %c0_i32_0 = arith.constant 0 : i32
    %c0_i32_1 = arith.constant 0 : i32
    return %arg1, %c0_i32, %c0_i32_0 : i32, i32, i32
  }
  func.func @transform_8(%arg0: i32, %arg1: i32) -> (i32, i32, i32) {
    %c0_i32 = arith.constant 0 : i32
    %c0_i32_0 = arith.constant 0 : i32
    %c0_i32_1 = arith.constant 0 : i32
    return %arg1, %c0_i32, %c0_i32_0 : i32, i32, i32
  }
  func.func @transform_9(%arg0: i32, %arg1: i32) -> (i32, i32, i32) {
    %c0_i32 = arith.constant 0 : i32
    %c0_i32_0 = arith.constant 0 : i32
    %c0_i32_1 = arith.constant 0 : i32
    return %arg1, %c0_i32, %c0_i32_0 : i32, i32, i32
  }
  func.func @transform_10(%arg0: i32, %arg1: i32) -> (i32, i32, i32) {
    %c0_i32 = arith.constant 0 : i32
    %c0_i32_0 = arith.constant 0 : i32
    %c0_i32_1 = arith.constant 0 : i32
    return %arg1, %c0_i32, %c0_i32_0 : i32, i32, i32
  }
  func.func @transform_11(%arg0: i32, %arg1: i32) -> (i32, i32, i32) {
    %c0_i32 = arith.constant 0 : i32
    %c0_i32_0 = arith.constant 0 : i32
    %c0_i32_1 = arith.constant 0 : i32
    return %arg1, %c0_i32, %c0_i32_0 : i32, i32, i32
  }
  func.func @transform_12(%arg0: i32, %arg1: i32) -> (i32, i32, i32) {
    %c0_i32 = arith.constant 0 : i32
    %c0_i32_0 = arith.constant 0 : i32
    %c0_i32_1 = arith.constant 0 : i32
    return %arg1, %c0_i32, %c0_i32_0 : i32, i32, i32
  }
  func.func @transform_13(%arg0: i32, %arg1: i32) -> (i32, i32, i32) {
    %c0_i32 = arith.constant 0 : i32
    %c0_i32_0 = arith.constant 0 : i32
    %c0_i32_1 = arith.constant 0 : i32
    return %arg0, %c0_i32, %c0_i32_0 : i32, i32, i32
  }
}

</mosaic_0001>

<llo_original>
// kernel: tpu_custom_call.1
$region0: #{tpu_custom_call.1}
  #allocation0 [shape = 'u32[]', space=smem, size = 0x4, offset = 0x4, fixed_abs, tag = 'smem constant byte address 0x4 - core index']
  #allocation1 [shape = 'u32[144,128]{1,0:T(1,128)}', space=vmem, size = 0x12000, scoped, tag = 'internal scratch']
  #allocation2 [shape = 'f32[8,32]{1,0:T(8,128)}', space=vmem, size = 0x1000, scoped, tag = 'scratch operand']
  %s0 = inlined_call_operand.hbm [shape: f32[2,8,32], index: 0, kind: input, shape index: {}]
  %s1 = inlined_call_operand.vmem [shape: bf16[2,32,96], index: 1, kind: input, shape index: {}]
  %s2 = inlined_call_operand.vmem [shape: f32[2,1,96], index: 2, kind: input, shape index: {}]
  %s3 = inlined_call_operand.vmem [shape: bf16[2,4,8,32], index: 3, kind: input, shape index: {}]
  %s4 = inlined_call_operand.hbm [shape: f32[2,1,32], index: 4, kind: input, shape index: {}]
  %s5 = inlined_call_operand.hbm [shape: f32[2,1,32], index: 5, kind: input, shape index: {}]
  %s6 = inlined_call_operand.hbm [shape: f32[2,1,32], index: 6, kind: input, shape index: {}]
  %s7 = inlined_call_operand.vmem [shape: bf16[2,32,64], index: 7, kind: input, shape index: {}]
  %s8 = inlined_call_operand.hbm [shape: f32[2,1,64], index: 8, kind: input, shape index: {}]
  %s9 = inlined_call_operand.vmem [shape: bf16[2,64,32], index: 9, kind: input, shape index: {}]
  %s10 = inlined_call_operand.vmem [shape: f32[2,1,32], index: 10, kind: input, shape index: {}]
  %s11 = inlined_call_operand.vmem [shape: f32[2,1,32], index: 11, kind: input, shape index: {}]
  %s12 = inlined_call_operand.vmem [shape: f32[2,1,32], index: 12, kind: input, shape index: {}]
  %s13 = inlined_call_operand.hbm [shape: f32[2,1,32], index: 13, kind: output, shape index: {}]
  %s14 = sld [smem:[#allocation0]]
  $region113: #{tpu_custom_call.1} parent=0
    _
  %s16 = ssub.s32 1, %s14
  %s17 = scalar_select 0, %s16, %s14
  $region1: #{tpu_custom_call.1} parent=0
    #allocation3 [shape = 'u8[8192]{0}', space=vmem, size = 0x2000, scoped, tag = 'input window, operand 0']
    #allocation4 [shape = 's32[2]{0}', space=sflag, size = 0x8, scoped, tag = 'scoped memory for tpu_custom_call.1']
    #allocation5 [shape = 's32[2]{0}', space=sflag, size = 0x8, scoped, tag = 'scoped memory for tpu_custom_call.1']
    #allocation6 [shape = 'u8[1024]{0}', space=vmem, size = 0x400, scoped, tag = 'input window, operand 4']
    #allocation7 [shape = 's32[2]{0}', space=sflag, size = 0x8, scoped, tag = 'scoped memory for tpu_custom_call.1']
    #allocation8 [shape = 'u8[1024]{0}', space=vmem, size = 0x400, scoped, tag = 'input window, operand 5']
    #allocation9 [shape = 'u8[1024]{0}', space=vmem, size = 0x400, scoped, tag = 'input window, operand 6']
    #allocation10 [shape = 's32[2]{0}', space=sflag, size = 0x8, scoped, tag = 'scoped memory for tpu_custom_call.1']
    #allocation11 [shape = 'u8[1024]{0}', space=vmem, size = 0x400, scoped, tag = 'input window, operand 8']
    #allocation12 [shape = 'u8[1024]{0}', space=vmem, size = 0x400, scoped, tag = 'output window, operand 0']
    %18 = vsyncpa [#allocation4], 0
    %s19 = scalar_lea.sflag [#allocation4], 1
    %20 = vsyncpa %s19, 0
    %21 = vsyncpa [#allocation7], 0
    %s22 = scalar_lea.sflag [#allocation7], 1
    %23 = vsyncpa %s22, 0
    %24 = vsyncpa [#allocation10], 0
    %s25 = scalar_lea.sflag [#allocation10], 1
    %26 = vsyncpa %s25, 0
    %27 = vsyncpa [#allocation5], 0
    %s28 = scalar_lea.sflag [#allocation5], 1
    %29 = vsyncpa %s28, 0
    loop: start=0, step=1, limit=6
    $region2: #{tpu_custom_call.1} parent=1 // loop_pre_header
      _
    $region3: #{tpu_custom_call.1} parent=1 // loop_header
      %s31 = sphi 0, %s35
      %p32 = scmp.ge.s32.totalorder %s31, 6
      %s38 = sphi 0, %s50
      %s39 = sphi 0, %s46
      %s40 = sphi 0, %s38
      %s41 = sphi 0, %s39
      %s42 = sphi 0, %s40
      %s43 = sphi 0, %s41
      %s53 = sphi 0, %s55
      %s56 = sphi 0, %s53
      %s57 = sphi 0, %s56
      %s73 = sphi 0, %s57
      %s79 = sphi 0, %s81
      %s82 = sphi 0, %s79
      %s83 = sphi 0, %s82
      %s99 = sphi 0, %s83
      %s105 = sphi 0, %s107
      %s108 = sphi 0, %s105
      %s109 = sphi 0, %s108
      %s125 = sphi 0, %s109
      %s131 = sphi 0, %s133
      %s134 = sphi 0, %s131
      %s135 = sphi 0, %s134
      %s151 = sphi 0, %s135
      %s157 = sphi 0, %s159
      %s160 = sphi 0, %s157
      %s161 = sphi 0, %s160
      %s177 = sphi 0, %s161
      %s183 = sphi 0, %s185
      %s186 = sphi 0, %s183
      %s187 = sphi 0, %s186
      %s203 = sphi 0, %s187
      %s209 = sphi 0, %s211
      %s212 = sphi 0, %s209
      %s213 = sphi 0, %s212
      %s229 = sphi 0, %s213
      %s235 = sphi 0, %s237
      %s238 = sphi 0, %s235
      %s239 = sphi 0, %s238
      %s255 = sphi 0, %s239
      %s261 = sphi 0, %s263
      %s264 = sphi 0, %s261
      %s265 = sphi 0, %s264
      %s281 = sphi 0, %s265
      %s287 = sphi 0, %s289
      %s290 = sphi 0, %s287
      %s291 = sphi 0, %s290
      %s307 = sphi 0, %s291
      %s313 = sphi 0, %s315
      %s316 = sphi 0, %s313
      %s317 = sphi 0, %s316
      %s333 = sphi 0, %s317
      %s339 = sphi 0, %s341
      %s342 = sphi 0, %s339
      %s343 = sphi 0, %s342
      %s359 = sphi 0, %s343
      %s365 = sphi 0, %s367
      %s368 = sphi 0, %s365
      %s369 = sphi 0, %s368
      %s385 = sphi 0, %s369
      %s391 = sphi 0, %s393
      %s394 = sphi 0, %s391
      %s395 = sphi 0, %s394
      %s411 = sphi 0, %s395
    $region4: #{tpu_custom_call.1} parent=1 // loop_header_branch
      %34 = sbr.rel (%p32) target = $region8
    $region5: #{tpu_custom_call.1} parent=1 // loop_body
      %s36 = ssub.s32 %s31, 1
      %s37 = ssub.s32 %s31, 2
      %s44 = sadd.s32 1, %s39
      %p45 = scmp.ge.s32.totalorder %s44, 2
      %s46 = scalar_select %p45, 0, %s44
      %s47 = sadd.s32 1, %s38
      %s48 = scalar_select %p45, %s47, %s38
      %p49 = scmp.ge.s32.totalorder %s48, 2
      %s50 = scalar_select %p49, 0, %s48
      %s51 = ssub.s32 %s38, %s50
      %p52 = scmp.eq.s32.totalorder %s51, 0
      %s54 = sadd.s32 %s53, 1
      %s55 = scalar_select %p52, %s53, %s54
      %p58 = pneg %p52
      %p59 = scmp.eq.s32.totalorder %s31, 3
      %p60 = por %p58, %p59
      %p61 = scmp.ne.s32.totalorder %s53, %s56
      %p62 = scmp.eq.s32.totalorder %s31, 0
      %p63 = por %p61, %p62
      %p64 = scmp.ne.s32.totalorder %s53, %s56
      %p65 = scmp.eq.s32.totalorder %s36, 3
      %p66 = por %p64, %p65
      %p67 = scmp.ne.s32.totalorder %s56, %s57
      %p68 = scmp.eq.s32.totalorder %s36, 0
      %p69 = por %p67, %p68
      %p70 = scmp.ne.s32.totalorder %s56, %s57
      %p71 = scmp.eq.s32.totalorder %s37, 3
      %p72 = por %p70, %p71
      %p74 = scmp.ne.s32.totalorder %s57, %s73
      %p75 = scmp.eq.s32.totalorder %s37, 0
      %p76 = por %p74, %p75
      %s77 = ssub.s32 %s39, %s46
      %p78 = scmp.eq.s32.totalorder %s77, 0
      %s80 = sadd.s32 %s79, 1
      %s81 = scalar_select %p78, %s79, %s80
      %p84 = pneg %p78
      %p85 = scmp.eq.s32.totalorder %s31, 3
      %p86 = por %p84, %p85
      %p87 = scmp.ne.s32.totalorder %s79, %s82
      %p88 = scmp.eq.s32.totalorder %s31, 0
      %p89 = por %p87, %p88
      %p90 = scmp.ne.s32.totalorder %s79, %s82
      %p91 = scmp.eq.s32.totalorder %s36, 3
      %p92 = por %p90, %p91
      %p93 = scmp.ne.s32.totalorder %s82, %s83
      %p94 = scmp.eq.s32.totalorder %s36, 0
      %p95 = por %p93, %p94
      %p96 = scmp.ne.s32.totalorder %s82, %s83
      %p97 = scmp.eq.s32.totalorder %s37, 3
      %p98 = por %p96, %p97
      %p100 = scmp.ne.s32.totalorder %s83, %s99
      %p101 = scmp.eq.s32.totalorder %s37, 0
      %p102 = por %p100, %p101
      %s103 = ssub.s32 %s39, %s46
      %p104 = scmp.eq.s32.totalorder %s103, 0
      %s106 = sadd.s32 %s105, 1
      %s107 = scalar_select %p104, %s105, %s106
      %p110 = pneg %p104
      %p111 = scmp.eq.s32.totalorder %s31, 3
      %p112 = por %p110, %p111
      %p113 = scmp.ne.s32.totalorder %s105, %s108
      %p114 = scmp.eq.s32.totalorder %s31, 0
      %p115 = por %p113, %p114
      %p116 = scmp.ne.s32.totalorder %s105, %s108
      %p117 = scmp.eq.s32.totalorder %s36, 3
      %p118 = por %p116, %p117
      %p119 = scmp.ne.s32.totalorder %s108, %s109
      %p120 = scmp.eq.s32.totalorder %s36, 0
      %p121 = por %p119, %p120
      %p122 = scmp.ne.s32.totalorder %s108, %s109
      %p123 = scmp.eq.s32.totalorder %s37, 3
      %p124 = por %p122, %p123
      %p126 = scmp.ne.s32.totalorder %s109, %s125
      %p127 = scmp.eq.s32.totalorder %s37, 0
      %p128 = por %p126, %p127
      %s129 = ssub.s32 %s39, %s46
      %p130 = scmp.eq.s32.totalorder %s129, 0
      %s132 = sadd.s32 %s131, 1
      %s133 = scalar_select %p130, %s131, %s132
      %p136 = pneg %p130
      %p137 = scmp.eq.s32.totalorder %s31, 3
      %p138 = por %p136, %p137
      %p139 = scmp.ne.s32.totalorder %s131, %s134
      %p140 = scmp.eq.s32.totalorder %s31, 0
      %p141 = por %p139, %p140
      %p142 = scmp.ne.s32.totalorder %s131, %s134
      %p143 = scmp.eq.s32.totalorder %s36, 3
      %p144 = por %p142, %p143
      %p145 = scmp.ne.s32.totalorder %s134, %s135
      %p146 = scmp.eq.s32.totalorder %s36, 0
      %p147 = por %p145, %p146
      %p148 = scmp.ne.s32.totalorder %s134, %s135
      %p149 = scmp.eq.s32.totalorder %s37, 3
      %p150 = por %p148, %p149
      %p152 = scmp.ne.s32.totalorder %s135, %s151
      %p153 = scmp.eq.s32.totalorder %s37, 0
      %p154 = por %p152, %p153
      %s155 = ssub.s32 %s39, %s46
      %p156 = scmp.eq.s32.totalorder %s155, 0
      %s158 = sadd.s32 %s157, 1
      %s159 = scalar_select %p156, %s157, %s158
      %p162 = pneg %p156
      %p163 = scmp.eq.s32.totalorder %s31, 3
      %p164 = por %p162, %p163
      %p165 = scmp.ne.s32.totalorder %s157, %s160
      %p166 = scmp.eq.s32.totalorder %s31, 0
      %p167 = por %p165, %p166
      %p168 = scmp.ne.s32.totalorder %s157, %s160
      %p169 = scmp.eq.s32.totalorder %s36, 3
      %p170 = por %p168, %p169
      %p171 = scmp.ne.s32.totalorder %s160, %s161
      %p172 = scmp.eq.s32.totalorder %s36, 0
      %p173 = por %p171, %p172
      %p174 = scmp.ne.s32.totalorder %s160, %s161
      %p175 = scmp.eq.s32.totalorder %s37, 3
      %p176 = por %p174, %p175
      %p178 = scmp.ne.s32.totalorder %s161, %s177
      %p179 = scmp.eq.s32.totalorder %s37, 0
      %p180 = por %p178, %p179
      %s181 = ssub.s32 %s39, %s46
      %p182 = scmp.eq.s32.totalorder %s181, 0
      %s184 = sadd.s32 %s183, 1
      %s185 = scalar_select %p182, %s183, %s184
      %p188 = pneg %p182
      %p189 = scmp.eq.s32.totalorder %s31, 3
      %p190 = por %p188, %p189
      %p191 = scmp.ne.s32.totalorder %s183, %s186
      %p192 = scmp.eq.s32.totalorder %s31, 0
      %p193 = por %p191, %p192
      %p194 = scmp.ne.s32.totalorder %s183, %s186
      %p195 = scmp.eq.s32.totalorder %s36, 3
      %p196 = por %p194, %p195
      %p197 = scmp.ne.s32.totalorder %s186, %s187
      %p198 = scmp.eq.s32.totalorder %s36, 0
      %p199 = por %p197, %p198
      %p200 = scmp.ne.s32.totalorder %s186, %s187
      %p201 = scmp.eq.s32.totalorder %s37, 3
      %p202 = por %p200, %p201
      %p204 = scmp.ne.s32.totalorder %s187, %s203
      %p205 = scmp.eq.s32.totalorder %s37, 0
      %p206 = por %p204, %p205
      %s207 = ssub.s32 %s39, %s46
      %p208 = scmp.eq.s32.totalorder %s207, 0
      %s210 = sadd.s32 %s209, 1
      %s211 = scalar_select %p208, %s209, %s210
      %p214 = pneg %p208
      %p215 = scmp.eq.s32.totalorder %s31, 3
      %p216 = por %p214, %p215
      %p217 = scmp.ne.s32.totalorder %s209, %s212
      %p218 = scmp.eq.s32.totalorder %s31, 0
      %p219 = por %p217, %p218
      %p220 = scmp.ne.s32.totalorder %s209, %s212
      %p221 = scmp.eq.s32.totalorder %s36, 3
      %p222 = por %p220, %p221
      %p223 = scmp.ne.s32.totalorder %s212, %s213
      %p224 = scmp.eq.s32.totalorder %s36, 0
      %p225 = por %p223, %p224
      %p226 = scmp.ne.s32.totalorder %s212, %s213
      %p227 = scmp.eq.s32.totalorder %s37, 3
      %p228 = por %p226, %p227
      %p230 = scmp.ne.s32.totalorder %s213, %s229
      %p231 = scmp.eq.s32.totalorder %s37, 0
      %p232 = por %p230, %p231
      %s233 = ssub.s32 %s39, %s46
      %p234 = scmp.eq.s32.totalorder %s233, 0
      %s236 = sadd.s32 %s235, 1
      %s237 = scalar_select %p234, %s235, %s236
      %p240 = pneg %p234
      %p241 = scmp.eq.s32.totalorder %s31, 3
      %p242 = por %p240, %p241
      %p243 = scmp.ne.s32.totalorder %s235, %s238
      %p244 = scmp.eq.s32.totalorder %s31, 0
      %p245 = por %p243, %p244
      %p246 = scmp.ne.s32.totalorder %s235, %s238
      %p247 = scmp.eq.s32.totalorder %s36, 3
      %p248 = por %p246, %p247
      %p249 = scmp.ne.s32.totalorder %s238, %s239
      %p250 = scmp.eq.s32.totalorder %s36, 0
      %p251 = por %p249, %p250
      %p252 = scmp.ne.s32.totalorder %s238, %s239
      %p253 = scmp.eq.s32.totalorder %s37, 3
      %p254 = por %p252, %p253
      %p256 = scmp.ne.s32.totalorder %s239, %s255
      %p257 = scmp.eq.s32.totalorder %s37, 0
      %p258 = por %p256, %p257
      %s259 = ssub.s32 %s39, %s46
      %p260 = scmp.eq.s32.totalorder %s259, 0
      %s262 = sadd.s32 %s261, 1
      %s263 = scalar_select %p260, %s261, %s262
      %p266 = pneg %p260
      %p267 = scmp.eq.s32.totalorder %s31, 3
      %p268 = por %p266, %p267
      %p269 = scmp.ne.s32.totalorder %s261, %s264
      %p270 = scmp.eq.s32.totalorder %s31, 0
      %p271 = por %p269, %p270
      %p272 = scmp.ne.s32.totalorder %s261, %s264
      %p273 = scmp.eq.s32.totalorder %s36, 3
      %p274 = por %p272, %p273
      %p275 = scmp.ne.s32.totalorder %s264, %s265
      %p276 = scmp.eq.s32.totalorder %s36, 0
      %p277 = por %p275, %p276
      %p278 = scmp.ne.s32.totalorder %s264, %s265
      %p279 = scmp.eq.s32.totalorder %s37, 3
      %p280 = por %p278, %p279
      %p282 = scmp.ne.s32.totalorder %s265, %s281
      %p283 = scmp.eq.s32.totalorder %s37, 0
      %p284 = por %p282, %p283
      %s285 = ssub.s32 %s39, %s46
      %p286 = scmp.eq.s32.totalorder %s285, 0
      %s288 = sadd.s32 %s287, 1
      %s289 = scalar_select %p286, %s287, %s288
      %p292 = pneg %p286
      %p293 = scmp.eq.s32.totalorder %s31, 3
      %p294 = por %p292, %p293
      %p295 = scmp.ne.s32.totalorder %s287, %s290
      %p296 = scmp.eq.s32.totalorder %s31, 0
      %p297 = por %p295, %p296
      %p298 = scmp.ne.s32.totalorder %s287, %s290
      %p299 = scmp.eq.s32.totalorder %s36, 3
      %p300 = por %p298, %p299
      %p301 = scmp.ne.s32.totalorder %s290, %s291
      %p302 = scmp.eq.s32.totalorder %s36, 0
      %p303 = por %p301, %p302
      %p304 = scmp.ne.s32.totalorder %s290, %s291
      %p305 = scmp.eq.s32.totalorder %s37, 3
      %p306 = por %p304, %p305
      %p308 = scmp.ne.s32.totalorder %s291, %s307
      %p309 = scmp.eq.s32.totalorder %s37, 0
      %p310 = por %p308, %p309
      %s311 = ssub.s32 %s39, %s46
      %p312 = scmp.eq.s32.totalorder %s311, 0
      %s314 = sadd.s32 %s313, 1
      %s315 = scalar_select %p312, %s313, %s314
      %p318 = pneg %p312
      %p319 = scmp.eq.s32.totalorder %s31, 3
      %p320 = por %p318, %p319
      %p321 = scmp.ne.s32.totalorder %s313, %s316
      %p322 = scmp.eq.s32.totalorder %s31, 0
      %p323 = por %p321, %p322
      %p324 = scmp.ne.s32.totalorder %s313, %s316
      %p325 = scmp.eq.s32.totalorder %s36, 3
      %p326 = por %p324, %p325
      %p327 = scmp.ne.s32.totalorder %s316, %s317
      %p328 = scmp.eq.s32.totalorder %s36, 0
      %p329 = por %p327, %p328
      %p330 = scmp.ne.s32.totalorder %s316, %s317
      %p331 = scmp.eq.s32.totalorder %s37, 3
      %p332 = por %p330, %p331
      %p334 = scmp.ne.s32.totalorder %s317, %s333
      %p335 = scmp.eq.s32.totalorder %s37, 0
      %p336 = por %p334, %p335
      %s337 = ssub.s32 %s39, %s46
      %p338 = scmp.eq.s32.totalorder %s337, 0
      %s340 = sadd.s32 %s339, 1
      %s341 = scalar_select %p338, %s339, %s340
      %p344 = pneg %p338
      %p345 = scmp.eq.s32.totalorder %s31, 3
      %p346 = por %p344, %p345
      %p347 = scmp.ne.s32.totalorder %s339, %s342
      %p348 = scmp.eq.s32.totalorder %s31, 0
      %p349 = por %p347, %p348
      %p350 = scmp.ne.s32.totalorder %s339, %s342
      %p351 = scmp.eq.s32.totalorder %s36, 3
      %p352 = por %p350, %p351
      %p353 = scmp.ne.s32.totalorder %s342, %s343
      %p354 = scmp.eq.s32.totalorder %s36, 0
      %p355 = por %p353, %p354
      %p356 = scmp.ne.s32.totalorder %s342, %s343
      %p357 = scmp.eq.s32.totalorder %s37, 3
      %p358 = por %p356, %p357
      %p360 = scmp.ne.s32.totalorder %s343, %s359
      %p361 = scmp.eq.s32.totalorder %s37, 0
      %p362 = por %p360, %p361
      %s363 = ssub.s32 %s39, %s46
      %p364 = scmp.eq.s32.totalorder %s363, 0
      %s366 = sadd.s32 %s365, 1
      %s367 = scalar_select %p364, %s365, %s366
      %p370 = pneg %p364
      %p371 = scmp.eq.s32.totalorder %s31, 3
      %p372 = por %p370, %p371
      %p373 = scmp.ne.s32.totalorder %s365, %s368
      %p374 = scmp.eq.s32.totalorder %s31, 0
      %p375 = por %p373, %p374
      %p376 = scmp.ne.s32.totalorder %s365, %s368
      %p377 = scmp.eq.s32.totalorder %s36, 3
      %p378 = por %p376, %p377
      %p379 = scmp.ne.s32.totalorder %s368, %s369
      %p380 = scmp.eq.s32.totalorder %s36, 0
      %p381 = por %p379, %p380
      %p382 = scmp.ne.s32.totalorder %s368, %s369
      %p383 = scmp.eq.s32.totalorder %s37, 3
      %p384 = por %p382, %p383
      %p386 = scmp.ne.s32.totalorder %s369, %s385
      %p387 = scmp.eq.s32.totalorder %s37, 0
      %p388 = por %p386, %p387
      %s389 = ssub.s32 %s38, %s50
      %p390 = scmp.eq.s32.totalorder %s389, 0
      %s392 = sadd.s32 %s391, 1
      %s393 = scalar_select %p390, %s391, %s392
      %p396 = pneg %p390
      %p397 = scmp.eq.s32.totalorder %s31, 3
      %p398 = por %p396, %p397
      %p399 = scmp.ne.s32.totalorder %s391, %s394
      %p400 = scmp.eq.s32.totalorder %s31, 0
      %p401 = por %p399, %p400
      %p402 = scmp.ne.s32.totalorder %s391, %s394
      %p403 = scmp.eq.s32.totalorder %s36, 3
      %p404 = por %p402, %p403
      %p405 = scmp.ne.s32.totalorder %s394, %s395
      %p406 = scmp.eq.s32.totalorder %s36, 0
      %p407 = por %p405, %p406
      %p408 = scmp.ne.s32.totalorder %s394, %s395
      %p409 = scmp.eq.s32.totalorder %s37, 3
      %p410 = por %p408, %p409
      %p412 = scmp.ne.s32.totalorder %s395, %s411
      %p413 = scmp.eq.s32.totalorder %s37, 0
      %p414 = por %p412, %p413
      %p415 = scmp.le.s32.totalorder 1, %s31
      %p416 = scmp.lt.s32.totalorder %s31, 5
      %p417 = pnand %p415, %p416
      %p418 = pneg %p417
      // Predicated region
      $region9: #{tpu_custom_call.1} parent=5 // pred_check
        _
      $region10: #{tpu_custom_call.1} parent=5 // pred_check_branch
        %420 = sbr.rel (%p417) target = $region12
      $region11: #{tpu_custom_call.1} parent=5 // pred_region
        %s421 = ssub.s32 %s31, 1
      $region12: #{tpu_custom_call.1} parent=5 // pred_fallthru
        _
      %p422 = scmp.lt.s32.totalorder %s31, 4
      // Predicated region
      $region13: #{tpu_custom_call.1} parent=5 // pred_check
        %p423 = pneg %p422
      $region14: #{tpu_custom_call.1} parent=5 // pred_check_branch
        %425 = sbr.rel (%p423) target = $region16
      $region15: #{tpu_custom_call.1} parent=5 // pred_region
        // Predicated region
        $region17: #{tpu_custom_call.1} parent=15 // pred_check
          %p426 = pneg %p63
        $region18: #{tpu_custom_call.1} parent=15 // pred_check_branch
          %428 = sbr.rel (%p426) target = $region20
        $region19: #{tpu_custom_call.1} parent=15 // pred_region
          %s429 = sand.u32 %s53, 1
          %s430 = scalar_lea.sflag [#allocation4], %s429
          %s431 = sand.u32 %s53, 1
          %s432 = smul.addr %s431, 8
          %s433 = scalar_lea.vmem [#allocation3], %s432
          %s435 = ssub.s32 128, 128
          %436 = vsyncadd %s430, %s435
          %s437 = smul.addr %s38, 128
          %s438 = scalar_lea.hbm %s0, %s437
          %s440 = sshll.u32 %s433, 4
          %s441 = int_to_ptr.vmem [resolvable:$true] %s440
          %443 = dma.hbm_to_vmem [thread:$0]  %s438, 128, %s441, %s430
        $region20: #{tpu_custom_call.1} parent=15 // pred_fallthru
          _
        // Predicated region
        $region21: #{tpu_custom_call.1} parent=15 // pred_check
          %p444 = pneg %p89
        $region22: #{tpu_custom_call.1} parent=15 // pred_check_branch
          %446 = sbr.rel (%p444) target = $region24
        $region23: #{tpu_custom_call.1} parent=15 // pred_region
          %p447 = scmp.lt.s32.totalorder %s39, 1
          %s448 = scalar_select %p447, %s39, 1
          %s449 = smul.addr %s448, 4
          %s450 = smul.addr %s449, 4
          %s451 = scalar_lea.vmem %s1, %s450
        $region24: #{tpu_custom_call.1} parent=15 // pred_fallthru
          _
        // Predicated region
        $region25: #{tpu_custom_call.1} parent=15 // pred_check
          %p452 = pneg %p115
        $region26: #{tpu_custom_call.1} parent=15 // pred_check_branch
          %454 = sbr.rel (%p452) target = $region28
        $region27: #{tpu_custom_call.1} parent=15 // pred_region
          %p455 = scmp.lt.s32.totalorder %s39, 1
          %s456 = scalar_select %p455, %s39, 1
          %s457 = scalar_lea.vmem %s2, %s456
        $region28: #{tpu_custom_call.1} parent=15 // pred_fallthru
          _
        // Predicated region
        $region29: #{tpu_custom_call.1} parent=15 // pred_check
          %p458 = pneg %p141
        $region30: #{tpu_custom_call.1} parent=15 // pred_check_branch
          %460 = sbr.rel (%p458) target = $region32
        $region31: #{tpu_custom_call.1} parent=15 // pred_region
          %p461 = scmp.lt.s32.totalorder %s39, 1
          %s462 = scalar_select %p461, %s39, 1
          %s463 = smul.addr %s462, 4
          %s464 = smul.addr %s463, 4
          %s465 = scalar_lea.vmem %s3, %s464
        $region32: #{tpu_custom_call.1} parent=15 // pred_fallthru
          _
        // Predicated region
        $region33: #{tpu_custom_call.1} parent=15 // pred_check
          %p466 = pneg %p167
        $region34: #{tpu_custom_call.1} parent=15 // pred_check_branch
          %468 = sbr.rel (%p466) target = $region36
        $region35: #{tpu_custom_call.1} parent=15 // pred_region
          %s469 = sand.u32 %s31, 1
          %s470 = scalar_lea.sflag [#allocation7], %s469
          %s471 = sand.u32 %s157, 1
          %s472 = scalar_lea.vmem [#allocation6], %s471
          %s474 = ssub.s32 16, 16
          %475 = vsyncadd %s470, %s474
          %s476 = smul.addr %s39, 16
          %s477 = scalar_lea.hbm %s4, %s476
          %s479 = sshll.u32 %s472, 4
          %s480 = int_to_ptr.vmem [resolvable:$true] %s479
          %482 = dma.hbm_to_vmem [thread:$0]  %s477, 16, %s480, %s470
        $region36: #{tpu_custom_call.1} parent=15 // pred_fallthru
          _
        // Predicated region
        $region37: #{tpu_custom_call.1} parent=15 // pred_check
          %p483 = pneg %p193
        $region38: #{tpu_custom_call.1} parent=15 // pred_check_branch
          %485 = sbr.rel (%p483) target = $region40
        $region39: #{tpu_custom_call.1} parent=15 // pred_region
          %s486 = sand.u32 %s31, 1
          %s487 = scalar_lea.sflag [#allocation7], %s486
          %s488 = sand.u32 %s183, 1
          %s489 = scalar_lea.vmem [#allocation8], %s488
          %s491 = ssub.s32 16, 16
          %492 = vsyncadd %s487, %s491
          %s493 = smul.addr %s39, 16
          %s494 = scalar_lea.hbm %s5, %s493
          %s496 = sshll.u32 %s489, 4
          %s497 = int_to_ptr.vmem [resolvable:$true] %s496
          %499 = dma.hbm_to_vmem [thread:$0]  %s494, 16, %s497, %s487
        $region40: #{tpu_custom_call.1} parent=15 // pred_fallthru
          _
        // Predicated region
        $region41: #{tpu_custom_call.1} parent=15 // pred_check
          %p500 = pneg %p219
        $region42: #{tpu_custom_call.1} parent=15 // pred_check_branch
          %502 = sbr.rel (%p500) target = $region44
        $region43: #{tpu_custom_call.1} parent=15 // pred_region
          %s503 = sand.u32 %s31, 1
          %s504 = scalar_lea.sflag [#allocation10], %s503
          %s505 = sand.u32 %s209, 1
          %s506 = scalar_lea.vmem [#allocation9], %s505
          %s508 = ssub.s32 16, 16
          %509 = vsyncadd %s504, %s508
          %s510 = smul.addr %s39, 16
          %s511 = scalar_lea.hbm %s6, %s510
          %s513 = sshll.u32 %s506, 4
          %s514 = int_to_ptr.vmem [resolvable:$true] %s513
          %516 = dma.hbm_to_vmem [thread:$0]  %s511, 16, %s514, %s504
        $region44: #{tpu_custom_call.1} parent=15 // pred_fallthru
          _
        // Predicated region
        $region45: #{tpu_custom_call.1} parent=15 // pred_check
          %p517 = pneg %p245
        $region46: #{tpu_custom_call.1} parent=15 // pred_check_branch
          %519 = sbr.rel (%p517) target = $region48
        $region47: #{tpu_custom_call.1} parent=15 // pred_region
          %p520 = scmp.lt.s32.totalorder %s39, 1
          %s521 = scalar_select %p520, %s39, 1
          %s522 = smul.addr %s521, 4
          %s523 = smul.addr %s522, 4
          %s524 = scalar_lea.vmem %s7, %s523
        $region48: #{tpu_custom_call.1} parent=15 // pred_fallthru
          _
        // Predicated region
        $region49: #{tpu_custom_call.1} parent=15 // pred_check
          %p525 = pneg %p271
        $region50: #{tpu_custom_call.1} parent=15 // pred_check_branch
          %527 = sbr.rel (%p525) target = $region52
        $region51: #{tpu_custom_call.1} parent=15 // pred_region
          %s528 = sand.u32 %s31, 1
          %s529 = scalar_lea.sflag [#allocation10], %s528
          %s530 = sand.u32 %s261, 1
          %s531 = scalar_lea.vmem [#allocation11], %s530
          %s533 = ssub.s32 16, 16
          %534 = vsyncadd %s529, %s533
          %s535 = smul.addr %s39, 16
          %s536 = scalar_lea.hbm %s8, %s535
          %s538 = sshll.u32 %s531, 4
          %s539 = int_to_ptr.vmem [resolvable:$true] %s538
          %541 = dma.hbm_to_vmem [thread:$0]  %s536, 16, %s539, %s529
        $region52: #{tpu_custom_call.1} parent=15 // pred_fallthru
          _
        // Predicated region
        $region53: #{tpu_custom_call.1} parent=15 // pred_check
          %p542 = pneg %p297
        $region54: #{tpu_custom_call.1} parent=15 // pred_check_branch
          %544 = sbr.rel (%p542) target = $region56
        $region55: #{tpu_custom_call.1} parent=15 // pred_region
          %p545 = scmp.lt.s32.totalorder %s39, 1
          %s546 = scalar_select %p545, %s39, 1
          %s547 = smul.addr %s546, 8
          %s548 = smul.addr %s547, 4
          %s549 = scalar_lea.vmem %s9, %s548
        $region56: #{tpu_custom_call.1} parent=15 // pred_fallthru
          _
        // Predicated region
        $region57: #{tpu_custom_call.1} parent=15 // pred_check
          %p550 = pneg %p323
        $region58: #{tpu_custom_call.1} parent=15 // pred_check_branch
          %552 = sbr.rel (%p550) target = $region60
        $region59: #{tpu_custom_call.1} parent=15 // pred_region
          %p553 = scmp.lt.s32.totalorder %s39, 1
          %s554 = scalar_select %p553, %s39, 1
          %s555 = scalar_lea.vmem %s10, %s554
        $region60: #{tpu_custom_call.1} parent=15 // pred_fallthru
          _
        // Predicated region
        $region61: #{tpu_custom_call.1} parent=15 // pred_check
          %p556 = pneg %p349
        $region62: #{tpu_custom_call.1} parent=15 // pred_check_branch
          %558 = sbr.rel (%p556) target = $region64
        $region63: #{tpu_custom_call.1} parent=15 // pred_region
          %p559 = scmp.lt.s32.totalorder %s39, 1
          %s560 = scalar_select %p559, %s39, 1
          %s561 = scalar_lea.vmem %s11, %s560
        $region64: #{tpu_custom_call.1} parent=15 // pred_fallthru
          _
        // Predicated region
        $region65: #{tpu_custom_call.1} parent=15 // pred_check
          %p562 = pneg %p375
        $region66: #{tpu_custom_call.1} parent=15 // pred_check_branch
          %564 = sbr.rel (%p562) target = $region68
        $region67: #{tpu_custom_call.1} parent=15 // pred_region
          %p565 = scmp.lt.s32.totalorder %s39, 1
          %s566 = scalar_select %p565, %s39, 1
          %s567 = scalar_lea.vmem %s12, %s566
        $region68: #{tpu_custom_call.1} parent=15 // pred_fallthru
          _
      $region16: #{tpu_custom_call.1} parent=5 // pred_fallthru
        _
      %p568 = scmp.le.s32.totalorder 1, %s31
      %p569 = scmp.lt.s32.totalorder %s31, 5
      %p570 = pnand %p568, %p569
      %p571 = pneg %p570
      // Predicated region
      $region69: #{tpu_custom_call.1} parent=5 // pred_check
        _
      $region70: #{tpu_custom_call.1} parent=5 // pred_check_branch
        %573 = sbr.rel (%p570) target = $region72
      $region71: #{tpu_custom_call.1} parent=5 // pred_region
        %s574 = ssub.s32 %s31, 1
        %s575 = sand.u32 %s56, 1
        %s576 = scalar_lea.sflag [#allocation4], %s575
        %s577 = sand.u32 %s56, 1
        %s578 = smul.addr %s577, 8
        %s579 = scalar_lea.vmem [#allocation3], %s578
        // Predicated region
        $region73: #{tpu_custom_call.1} parent=71 // pred_check
          %p580 = pneg %p69
        $region74: #{tpu_custom_call.1} parent=71 // pred_check_branch
          %582 = sbr.rel (%p580) target = $region76
        $region75: #{tpu_custom_call.1} parent=71 // pred_region
          %583 = dma.done %s576, 128
        $region76: #{tpu_custom_call.1} parent=71 // pred_fallthru
          _
        %s584 = sand.u32 %s36, 1
        %s585 = scalar_lea.sflag [#allocation7], %s584
        %s586 = sand.u32 %s160, 1
        %s587 = scalar_lea.vmem [#allocation6], %s586
        // Predicated region
        $region77: #{tpu_custom_call.1} parent=71 // pred_check
          %p588 = pneg %p173
        $region78: #{tpu_custom_call.1} parent=71 // pred_check_branch
          %590 = sbr.rel (%p588) target = $region80
        $region79: #{tpu_custom_call.1} parent=71 // pred_region
          %591 = dma.done %s585, 16
        $region80: #{tpu_custom_call.1} parent=71 // pred_fallthru
          _
        %s592 = sand.u32 %s36, 1
        %s593 = scalar_lea.sflag [#allocation7], %s592
        %s594 = sand.u32 %s186, 1
        %s595 = scalar_lea.vmem [#allocation8], %s594
        // Predicated region
        $region81: #{tpu_custom_call.1} parent=71 // pred_check
          %p596 = pneg %p199
        $region82: #{tpu_custom_call.1} parent=71 // pred_check_branch
          %598 = sbr.rel (%p596) target = $region84
        $region83: #{tpu_custom_call.1} parent=71 // pred_region
          %599 = dma.done %s593, 16
        $region84: #{tpu_custom_call.1} parent=71 // pred_fallthru
          _
        %s600 = sand.u32 %s36, 1
        %s601 = scalar_lea.sflag [#allocation10], %s600
        %s602 = sand.u32 %s212, 1
        %s603 = scalar_lea.vmem [#allocation9], %s602
        // Predicated region
        $region85: #{tpu_custom_call.1} parent=71 // pred_check
          %p604 = pneg %p225
        $region86: #{tpu_custom_call.1} parent=71 // pred_check_branch
          %606 = sbr.rel (%p604) target = $region88
        $region87: #{tpu_custom_call.1} parent=71 // pred_region
          %607 = dma.done %s601, 16
        $region88: #{tpu_custom_call.1} parent=71 // pred_fallthru
          _
        %s608 = sand.u32 %s36, 1
        %s609 = scalar_lea.sflag [#allocation10], %s608
        %s610 = sand.u32 %s264, 1
        %s611 = scalar_lea.vmem [#allocation11], %s610
        // Predicated region
        $region89: #{tpu_custom_call.1} parent=71 // pred_check
          %p612 = pneg %p277
        $region90: #{tpu_custom_call.1} parent=71 // pred_check_branch
          %614 = sbr.rel (%p612) target = $region92
        $region91: #{tpu_custom_call.1} parent=71 // pred_region
          %615 = dma.done %s609, 16
        $region92: #{tpu_custom_call.1} parent=71 // pred_fallthru
          _
        %s616 = sand.u32 %s56, 1
        %s617 = scalar_lea.sflag [#allocation4], %s616
        %s618 = sand.u32 %s56, 1
        %s619 = smul.addr %s618, 8
        %s620 = scalar_lea.vmem [#allocation3], %s619
        %p621 = pneg %p69
        %p622 = pneg %p66
        %p623 = scmp.lt.s32.totalorder %s41, 1
        %s624 = scalar_select %p623, %s41, 1
        %s625 = smul.addr %s624, 4
        %s626 = smul.addr %s625, 4
        %s627 = scalar_lea.vmem %s1, %s626
        %p628 = pneg %p95
        %p629 = pneg %p92
        %p630 = scmp.lt.s32.totalorder %s41, 1
        %s631 = scalar_select %p630, %s41, 1
        %s632 = scalar_lea.vmem %s2, %s631
        %p633 = pneg %p121
        %p634 = pneg %p118
        %p635 = scmp.lt.s32.totalorder %s41, 1
        %s636 = scalar_select %p635, %s41, 1
        %s637 = smul.addr %s636, 4
        %s638 = smul.addr %s637, 4
        %s639 = scalar_lea.vmem %s3, %s638
        %p640 = pneg %p147
        %p641 = pneg %p144
        %s642 = sand.u32 %s36, 1
        %s643 = scalar_lea.sflag [#allocation7], %s642
        %s644 = sand.u32 %s160, 1
        %s645 = scalar_lea.vmem [#allocation6], %s644
        %p646 = pneg %p173
        %p647 = pneg %p170
        %s648 = sand.u32 %s36, 1
        %s649 = scalar_lea.sflag [#allocation7], %s648
        %s650 = sand.u32 %s186, 1
        %s651 = scalar_lea.vmem [#allocation8], %s650
        %p652 = pneg %p199
        %p653 = pneg %p196
        %s654 = sand.u32 %s36, 1
        %s655 = scalar_lea.sflag [#allocation10], %s654
        %s656 = sand.u32 %s212, 1
        %s657 = scalar_lea.vmem [#allocation9], %s656
        %p658 = pneg %p225
        %p659 = pneg %p222
        %p660 = scmp.lt.s32.totalorder %s41, 1
        %s661 = scalar_select %p660, %s41, 1
        %s662 = smul.addr %s661, 4
        %s663 = smul.addr %s662, 4
        %s664 = scalar_lea.vmem %s7, %s663
        %p665 = pneg %p251
        %p666 = pneg %p248
        %s667 = sand.u32 %s36, 1
        %s668 = scalar_lea.sflag [#allocation10], %s667
        %s669 = sand.u32 %s264, 1
        %s670 = scalar_lea.vmem [#allocation11], %s669
        %p671 = pneg %p277
        %p672 = pneg %p274
        %p673 = scmp.lt.s32.totalorder %s41, 1
        %s674 = scalar_select %p673, %s41, 1
        %s675 = smul.addr %s674, 8
        %s676 = smul.addr %s675, 4
        %s677 = scalar_lea.vmem %s9, %s676
        %p678 = pneg %p303
        %p679 = pneg %p300
        %p680 = scmp.lt.s32.totalorder %s41, 1
        %s681 = scalar_select %p680, %s41, 1
        %s682 = scalar_lea.vmem %s10, %s681
        %p683 = pneg %p329
        %p684 = pneg %p326
        %p685 = scmp.lt.s32.totalorder %s41, 1
        %s686 = scalar_select %p685, %s41, 1
        %s687 = scalar_lea.vmem %s11, %s686
        %p688 = pneg %p355
        %p689 = pneg %p352
        %p690 = scmp.lt.s32.totalorder %s41, 1
        %s691 = scalar_select %p690, %s41, 1
        %s692 = scalar_lea.vmem %s12, %s691
        %p693 = pneg %p381
        %p694 = pneg %p378
        %p695 = pneg %p407
        %p696 = pneg %p404
        %s697 = sand.u32 %s394, 1
        %s698 = scalar_lea.sflag [#allocation5], %s697
        %s699 = sand.u32 %s394, 1
        %s700 = scalar_lea.vmem [#allocation12], %s699
        %p701 = scmp.lt.s32.totalorder %s41, 1
        %s702 = scalar_select %p701, %s41, 1
        %s703 = smul.addr %s702, 4
        %s704 = smul.addr %s703, 4
        %s705 = scalar_lea.vmem %s1, %s704
        %p706 = scmp.lt.s32.totalorder %s41, 1
        %s707 = scalar_select %p706, %s41, 1
        %s708 = scalar_lea.vmem %s2, %s707
        %p709 = scmp.lt.s32.totalorder %s41, 1
        %s710 = scalar_select %p709, %s41, 1
        %s711 = smul.addr %s710, 4
        %s712 = smul.addr %s711, 4
        %s713 = scalar_lea.vmem %s3, %s712
        %p714 = scmp.lt.s32.totalorder %s41, 1
        %s715 = scalar_select %p714, %s41, 1
        %s716 = smul.addr %s715, 4
        %s717 = smul.addr %s716, 4
        %s718 = scalar_lea.vmem %s7, %s717
        %p719 = scmp.lt.s32.totalorder %s41, 1
        %s720 = scalar_select %p719, %s41, 1
        %s721 = smul.addr %s720, 8
        %s722 = smul.addr %s721, 4
        %s723 = scalar_lea.vmem %s9, %s722
        %p724 = scmp.lt.s32.totalorder %s41, 1
        %s725 = scalar_select %p724, %s41, 1
        %s726 = scalar_lea.vmem %s10, %s725
        %p727 = scmp.lt.s32.totalorder %s41, 1
        %s728 = scalar_select %p727, %s41, 1
        %s729 = scalar_lea.vmem %s11, %s728
        %p730 = scmp.lt.s32.totalorder %s41, 1
        %s731 = scalar_select %p730, %s41, 1
        %s732 = scalar_lea.vmem %s12, %s731
        %p734 = scmp.eq.s32.totalorder %s41, 0
        // Predicated region
        $region93: #{tpu_custom_call.1} parent=71 // pred_check
          %p735 = pneg %p734
        $region94: #{tpu_custom_call.1} parent=71 // pred_check_branch
          %737 = sbr.rel (%p735) target = $region96
        $region95: #{tpu_custom_call.1} parent=71 // pred_region
          %v738 = vld [vmem:[%s579] sm:$0xff]
          %vm739 = vcmask 261120
          %740 = vst.msk [vmem:[#allocation2] sm:$0xff] %vm739, %v738
        $region96: #{tpu_custom_call.1} parent=71 // pred_fallthru
          _
        %v741 = vld [vmem:[#allocation2] sm:$0xff]
        %v742 = vld [vmem:[%s705] sm:$0xf]
        %v743 = vld [vmem:[%s705 + $0x4] sm:$0xf]
        %v744 = vld [vmem:[%s705 + $0x8] sm:$0xf]
        %v745 = vld [vmem:[%s705 + $0xc] sm:$0xf]
        %v746 = vpack.c.bf16 %v741, %v741
        %v747 = vld [vmem:[%s708] sm:$0x1]
        %v749 = vlaneseq
        %v750 = vshrl.u32 %v749, 7
        %v751 = vsub.s32 0, %v750
        %v752 = vrot.slane %v747, %v751
        %v758 = vunpack.c.l.b16 %v742
        %v759 = vunpack.c.l.b16 %v743
        %v760 = vunpack.c.l.b16 %v744
        %v761 = vunpack.c.l.b16 %v745
        %v762 = vpack.c.b16 %v759, %v758
        %v763 = vpack.c.b16 %v761, %v760
        %vm766 = vcmask 261120
        %v768 = vsel %vm766, %v746, 0
        %770 = vmatprep.subr.bf16.mxu0 0
        %771 = vmatpush1.bf16.msra.mxu0 %v762
        %772 = vmatprep.subr.bf16.mxu0 0
        %773 = vmatpush1.bf16.msra.mxu0 %v763
        %774 = vmatprep.subr.bf16.mxu0 0
        %775 = vmatpush1.bf16.msra.mxu0 0
        %776 = vmatprep.subr.bf16.mxu0 0
        %777 = vmatpush1.bf16.msra.mxu0 0
        %778 = vmatprep.subr.bf16.mxu0 0
        %779 = vmatpush1.bf16.msra.mxu0 0
        %780 = vmatprep.subr.bf16.mxu0 0
        %781 = vmatpush1.bf16.msra.mxu0 0
        %782 = vmatprep.subr.bf16.mxu0 0
        %783 = vmatpush1.bf16.msra.mxu0 0
        %784 = vmatprep.subr.bf16.mxu0 0
        %785 = vmatpush1.bf16.msra.mxu0 0
        %786 = vmatprep.subr.bf16.mxu0 0
        %787 = vmatpush1.bf16.msra.mxu0 0
        %788 = vmatprep.subr.bf16.mxu0 0
        %789 = vmatpush1.bf16.msra.mxu0 0
        %790 = vmatprep.subr.bf16.mxu0 0
        %791 = vmatpush1.bf16.msra.mxu0 0
        %792 = vmatprep.subr.bf16.mxu0 0
        %793 = vmatpush1.bf16.msra.mxu0 0
        %794 = vmatprep.subr.bf16.mxu0 0
        %795 = vmatpush1.bf16.msra.mxu0 0
        %796 = vmatprep.subr.bf16.mxu0 0
        %797 = vmatpush1.bf16.msra.mxu0 0
        %798 = vmatprep.subr.bf16.mxu0 0
        %799 = vmatpush1.bf16.msra.mxu0 0
        %800 = vmatprep.subr.bf16.mxu0 0
        %801 = vmatpush1.bf16.msra.mxu0 0
        %802 = vmatprep.mubr.bf16.mxu0 0
        %803 = vmatmul.mubr.bf16.gmra.mrb[0].mxu0 %v768
        %v804 = vpop.f32.mrb[0].mxu0
        %v805 = vadd.f32 %v752, %v804
        %v806 = vpop.f32.mrb[0].mxu0
        %v807 = vpop.f32.mrb[0].mxu0
        %v808 = vpop.f32.mrb[0].mxu0
        %809 = vdwg.mxu0
        %811 = vrot.lane.b32.xlu0 %v805, 120
        %v812 = vpop.permute.xlu0 %811
        %814 = vrot.lane.b32.xlu0 %v805, 112
        %v815 = vpop.permute.xlu0 %814
        %817 = vrot.lane.b32.xlu0 %v805, 104
        %v818 = vpop.permute.xlu0 %817
        %v820 = vpack.c.bf16 %v805, %v805
        %v821 = vpack.c.bf16 %v812, %v812
        %v822 = vpack.c.bf16 %v815, %v815
        %v823 = vpack.c.bf16 %v818, %v818
        %825 = vrot.lane.b32.xlu0 %v820, 96
        %v826 = vpop.permute.xlu0 %825
        %vm827 = vcmask 64512
        %v829 = vsel %vm827, %v820, 0
        %v832 = vsel %vm827, %v826, 0
        %834 = vmatprep.subr.bf16.mxu0 0
        %835 = vmatpush1.bf16.xpose.msra.mxu0 %v832
        %836 = vmatprep.subr.bf16.mxu0 0
        %837 = vmatpush1.bf16.xpose.msra.mxu0 0
        %838 = vmatprep.subr.bf16.mxu0 0
        %839 = vmatpush1.bf16.xpose.msra.mxu0 0
        %840 = vmatprep.subr.bf16.mxu0 0
        %841 = vmatpush1.bf16.xpose.msra.mxu0 0
        %842 = vmatprep.subr.bf16.mxu0 0
        %843 = vmatpush1.bf16.xpose.msra.mxu0 0
        %844 = vmatprep.subr.bf16.mxu0 0
        %845 = vmatpush1.bf16.xpose.msra.mxu0 0
        %846 = vmatprep.subr.bf16.mxu0 0
        %847 = vmatpush1.bf16.xpose.msra.mxu0 0
        %848 = vmatprep.subr.bf16.mxu0 0
        %849 = vmatpush1.bf16.xpose.msra.mxu0 0
        %850 = vmatprep.subr.bf16.mxu0 0
        %851 = vmatpush1.bf16.xpose.msra.mxu0 0
        %852 = vmatprep.subr.bf16.mxu0 0
        %853 = vmatpush1.bf16.xpose.msra.mxu0 0
        %854 = vmatprep.subr.bf16.mxu0 0
        %855 = vmatpush1.bf16.xpose.msra.mxu0 0
        %856 = vmatprep.subr.bf16.mxu0 0
        %857 = vmatpush1.bf16.xpose.msra.mxu0 0
        %858 = vmatprep.subr.bf16.mxu0 0
        %859 = vmatpush1.bf16.xpose.msra.mxu0 0
        %860 = vmatprep.subr.bf16.mxu0 0
        %861 = vmatpush1.bf16.xpose.msra.mxu0 0
        %862 = vmatprep.subr.bf16.mxu0 0
        %863 = vmatpush1.bf16.xpose.msra.mxu0 0
        %864 = vmatprep.subr.bf16.mxu0 0
        %865 = vmatpush1.bf16.xpose.msra.mxu0 0
        %866 = vmatprep.mubr.bf16.mxu0 0
        %867 = vmatmul.mubr.bf16.gmra.mrb[0].mxu0 %v829
        %v868 = vpop.f32.mrb[0].mxu0
        %v869 = vadd.f32 0.0, %v868
        %v870 = vpop.f32.mrb[0].mxu0
        %v871 = vpop.f32.mrb[0].mxu0
        %v872 = vpop.f32.mrb[0].mxu0
        %873 = vdwg.mxu0
        %875 = vrot.lane.b32.xlu0 %v821, 96
        %v876 = vpop.permute.xlu0 %875
        %v878 = vsel %vm827, %v821, 0
        %v881 = vsel %vm827, %v876, 0
        %883 = vmatprep.subr.bf16.mxu0 0
        %884 = vmatpush1.bf16.xpose.msra.mxu0 %v881
        %885 = vmatprep.subr.bf16.mxu0 0
        %886 = vmatpush1.bf16.xpose.msra.mxu0 0
        %887 = vmatprep.subr.bf16.mxu0 0
        %888 = vmatpush1.bf16.xpose.msra.mxu0 0
        %889 = vmatprep.subr.bf16.mxu0 0
        %890 = vmatpush1.bf16.xpose.msra.mxu0 0
        %891 = vmatprep.subr.bf16.mxu0 0
        %892 = vmatpush1.bf16.xpose.msra.mxu0 0
        %893 = vmatprep.subr.bf16.mxu0 0
        %894 = vmatpush1.bf16.xpose.msra.mxu0 0
        %895 = vmatprep.subr.bf16.mxu0 0
        %896 = vmatpush1.bf16.xpose.msra.mxu0 0
        %897 = vmatprep.subr.bf16.mxu0 0
        %898 = vmatpush1.bf16.xpose.msra.mxu0 0
        %899 = vmatprep.subr.bf16.mxu0 0
        %900 = vmatpush1.bf16.xpose.msra.mxu0 0
        %901 = vmatprep.subr.bf16.mxu0 0
        %902 = vmatpush1.bf16.xpose.msra.mxu0 0
        %903 = vmatprep.subr.bf16.mxu0 0
        %904 = vmatpush1.bf16.xpose.msra.mxu0 0
        %905 = vmatprep.subr.bf16.mxu0 0
        %906 = vmatpush1.bf16.xpose.msra.mxu0 0
        %907 = vmatprep.subr.bf16.mxu0 0
        %908 = vmatpush1.bf16.xpose.msra.mxu0 0
        %909 = vmatprep.subr.bf16.mxu0 0
        %910 = vmatpush1.bf16.xpose.msra.mxu0 0
        %911 = vmatprep.subr.bf16.mxu0 0
        %912 = vmatpush1.bf16.xpose.msra.mxu0 0
        %913 = vmatprep.subr.bf16.mxu0 0
        %914 = vmatpush1.bf16.xpose.msra.mxu0 0
        %915 = vmatprep.mubr.bf16.mxu0 0
        %916 = vmatmul.mubr.bf16.gmra.mrb[0].mxu0 %v878
        %v917 = vpop.f32.mrb[0].mxu0
        %v918 = vadd.f32 0.0, %v917
        %v919 = vpop.f32.mrb[0].mxu0
        %v920 = vpop.f32.mrb[0].mxu0
        %v921 = vpop.f32.mrb[0].mxu0
        %922 = vdwg.mxu0
        %924 = vrot.lane.b32.xlu0 %v822, 96
        %v925 = vpop.permute.xlu0 %924
        %v927 = vsel %vm827, %v822, 0
        %v930 = vsel %vm827, %v925, 0
        %932 = vmatprep.subr.bf16.mxu0 0
        %933 = vmatpush1.bf16.xpose.msra.mxu0 %v930
        %934 = vmatprep.subr.bf16.mxu0 0
        %935 = vmatpush1.bf16.xpose.msra.mxu0 0
        %936 = vmatprep.subr.bf16.mxu0 0
        %937 = vmatpush1.bf16.xpose.msra.mxu0 0
        %938 = vmatprep.subr.bf16.mxu0 0
        %939 = vmatpush1.bf16.xpose.msra.mxu0 0
        %940 = vmatprep.subr.bf16.mxu0 0
        %941 = vmatpush1.bf16.xpose.msra.mxu0 0
        %942 = vmatprep.subr.bf16.mxu0 0
        %943 = vmatpush1.bf16.xpose.msra.mxu0 0
        %944 = vmatprep.subr.bf16.mxu0 0
        %945 = vmatpush1.bf16.xpose.msra.mxu0 0
        %946 = vmatprep.subr.bf16.mxu0 0
        %947 = vmatpush1.bf16.xpose.msra.mxu0 0
        %948 = vmatprep.subr.bf16.mxu0 0
        %949 = vmatpush1.bf16.xpose.msra.mxu0 0
        %950 = vmatprep.subr.bf16.mxu0 0
        %951 = vmatpush1.bf16.xpose.msra.mxu0 0
        %952 = vmatprep.subr.bf16.mxu0 0
        %953 = vmatpush1.bf16.xpose.msra.mxu0 0
        %954 = vmatprep.subr.bf16.mxu0 0
        %955 = vmatpush1.bf16.xpose.msra.mxu0 0
        %956 = vmatprep.subr.bf16.mxu0 0
        %957 = vmatpush1.bf16.xpose.msra.mxu0 0
        %958 = vmatprep.subr.bf16.mxu0 0
        %959 = vmatpush1.bf16.xpose.msra.mxu0 0
        %960 = vmatprep.subr.bf16.mxu0 0
        %961 = vmatpush1.bf16.xpose.msra.mxu0 0
        %962 = vmatprep.subr.bf16.mxu0 0
        %963 = vmatpush1.bf16.xpose.msra.mxu0 0
        %964 = vmatprep.mubr.bf16.mxu0 0
        %965 = vmatmul.mubr.bf16.gmra.mrb[0].mxu0 %v927
        %v966 = vpop.f32.mrb[0].mxu0
        %v967 = vadd.f32 0.0, %v966
        %v968 = vpop.f32.mrb[0].mxu0
        %v969 = vpop.f32.mrb[0].mxu0
        %v970 = vpop.f32.mrb[0].mxu0
        %971 = vdwg.mxu0
        %973 = vrot.lane.b32.xlu0 %v823, 96
        %v974 = vpop.permute.xlu0 %973
        %v976 = vsel %vm827, %v823, 0
        %v979 = vsel %vm827, %v974, 0
        %981 = vmatprep.subr.bf16.mxu0 0
        %982 = vmatpush1.bf16.xpose.msra.mxu0 %v979
        %983 = vmatprep.subr.bf16.mxu0 0
        %984 = vmatpush1.bf16.xpose.msra.mxu0 0
        %985 = vmatprep.subr.bf16.mxu0 0
        %986 = vmatpush1.bf16.xpose.msra.mxu0 0
        %987 = vmatprep.subr.bf16.mxu0 0
        %988 = vmatpush1.bf16.xpose.msra.mxu0 0
        %989 = vmatprep.subr.bf16.mxu0 0
        %990 = vmatpush1.bf16.xpose.msra.mxu0 0
        %991 = vmatprep.subr.bf16.mxu0 0
        %992 = vmatpush1.bf16.xpose.msra.mxu0 0
        %993 = vmatprep.subr.bf16.mxu0 0
        %994 = vmatpush1.bf16.xpose.msra.mxu0 0
        %995 = vmatprep.subr.bf16.mxu0 0
        %996 = vmatpush1.bf16.xpose.msra.mxu0 0
        %997 = vmatprep.subr.bf16.mxu0 0
        %998 = vmatpush1.bf16.xpose.msra.mxu0 0
        %999 = vmatprep.subr.bf16.mxu0 0
        %1000 = vmatpush1.bf16.xpose.msra.mxu0 0
        %1001 = vmatprep.subr.bf16.mxu0 0
        %1002 = vmatpush1.bf16.xpose.msra.mxu0 0
        %1003 = vmatprep.subr.bf16.mxu0 0
        %1004 = vmatpush1.bf16.xpose.msra.mxu0 0
        %1005 = vmatprep.subr.bf16.mxu0 0
        %1006 = vmatpush1.bf16.xpose.msra.mxu0 0
        %1007 = vmatprep.subr.bf16.mxu0 0
        %1008 = vmatpush1.bf16.xpose.msra.mxu0 0
        %1009 = vmatprep.subr.bf16.mxu0 0
        %1010 = vmatpush1.bf16.xpose.msra.mxu0 0
        %1011 = vmatprep.subr.bf16.mxu0 0
        %1012 = vmatpush1.bf16.xpose.msra.mxu0 0
        %1013 = vmatprep.mubr.bf16.mxu0 0
        %1014 = vmatmul.mubr.bf16.gmra.mrb[0].mxu0 %v976
        %v1015 = vpop.f32.mrb[0].mxu0
        %v1016 = vadd.f32 0.0, %v1015
        %v1017 = vpop.f32.mrb[0].mxu0
        %v1018 = vpop.f32.mrb[0].mxu0
        %v1019 = vpop.f32.mrb[0].mxu0
        %1020 = vdwg.mxu0
        %v1021 = vsel %vm827, %v869, -inf
        %1022 = vmax.xlane.f32.xlu0 %v1021
        %v1023 = vpop.xlane.xlu0 %1022
        %v1024 = vsel %vm827, %v918, -inf
        %1025 = vmax.xlane.f32.xlu0 %v1024
        %v1026 = vpop.xlane.xlu0 %1025
        %v1027 = vsel %vm827, %v967, -inf
        %1028 = vmax.xlane.f32.xlu0 %v1027
        %v1029 = vpop.xlane.xlu0 %1028
        %v1030 = vsel %vm827, %v1016, -inf
        %1031 = vmax.xlane.f32.xlu0 %v1030
        %v1032 = vpop.xlane.xlu0 %1031
        %v1033 = vsub.f32 %v869, %v1023
        %v1034 = vsub.f32 %v918, %v1026
        %v1035 = vsub.f32 %v967, %v1029
        %v1036 = vsub.f32 %v1016, %v1032
        %v1037 = vmul.f32 %v1033, 1.442695
        %v1038 = vpow.pop %v1037
        %v1039 = vmul.f32 %v1034, 1.442695
        %v1040 = vpow.pop %v1039
        %v1041 = vmul.f32 %v1035, 1.442695
        %v1042 = vpow.pop %v1041
        %v1043 = vmul.f32 %v1036, 1.442695
        %v1044 = vpow.pop %v1043
        %v1045 = vsel %vm827, %v1038, 0.0
        %1046 = vadd.xlane.f32.xlu0 %v1045
        %v1047 = vpop.xlane.xlu0 %1046
        %v1048 = vsel %vm827, %v1040, 0.0
        %1049 = vadd.xlane.f32.xlu0 %v1048
        %v1050 = vpop.xlane.xlu0 %1049
        %v1051 = vsel %vm827, %v1042, 0.0
        %1052 = vadd.xlane.f32.xlu0 %v1051
        %v1053 = vpop.xlane.xlu0 %1052
        %v1054 = vsel %vm827, %v1044, 0.0
        %1055 = vadd.xlane.f32.xlu0 %v1054
        %v1056 = vpop.xlane.xlu0 %1055
        %v1057 = vrcp.pop %v1047
        %v1058 = vrcp.pop %v1050
        %v1059 = vrcp.pop %v1053
        %v1060 = vrcp.pop %v1056
        %v1061 = vmul.f32 %v1038, %v1057
        %v1062 = vmul.f32 %v1040, %v1058
        %v1063 = vmul.f32 %v1042, %v1059
        %v1064 = vmul.f32 %v1044, %v1060
        %v1065 = vpack.c.bf16 %v1061, %v1061
        %v1066 = vpack.c.bf16 %v1062, %v1062
        %v1067 = vpack.c.bf16 %v1063, %v1063
        %v1068 = vpack.c.bf16 %v1064, %v1064
        %1069 = vrot.lane.b32.xlu0 %v820, 64
        %v1070 = vpop.permute.xlu0 %1069
        %v1072 = vsel %vm827, %v1065, 0
        %vm1074 = vcmask 1043456
        %v1076 = vsel %vm1074, %v1070, 0
        %1078 = vmatprep.subr.bf16.mxu0 0
        %1079 = vmatpush1.bf16.msra.mxu0 %v1076
        %1080 = vmatprep.subr.bf16.mxu0 0
        %1081 = vmatpush1.bf16.msra.mxu0 0
        %1082 = vmatprep.subr.bf16.mxu0 0
        %1083 = vmatpush1.bf16.msra.mxu0 0
        %1084 = vmatprep.subr.bf16.mxu0 0
        %1085 = vmatpush1.bf16.msra.mxu0 0
        %1086 = vmatprep.subr.bf16.mxu0 0
        %1087 = vmatpush1.bf16.msra.mxu0 0
        %1088 = vmatprep.subr.bf16.mxu0 0
        %1089 = vmatpush1.bf16.msra.mxu0 0
        %1090 = vmatprep.subr.bf16.mxu0 0
        %1091 = vmatpush1.bf16.msra.mxu0 0
        %1092 = vmatprep.subr.bf16.mxu0 0
        %1093 = vmatpush1.bf16.msra.mxu0 0
        %1094 = vmatprep.subr.bf16.mxu0 0
        %1095 = vmatpush1.bf16.msra.mxu0 0
        %1096 = vmatprep.subr.bf16.mxu0 0
        %1097 = vmatpush1.bf16.msra.mxu0 0
        %1098 = vmatprep.subr.bf16.mxu0 0
        %1099 = vmatpush1.bf16.msra.mxu0 0
        %1100 = vmatprep.subr.bf16.mxu0 0
        %1101 = vmatpush1.bf16.msra.mxu0 0
        %1102 = vmatprep.subr.bf16.mxu0 0
        %1103 = vmatpush1.bf16.msra.mxu0 0
        %1104 = vmatprep.subr.bf16.mxu0 0
        %1105 = vmatpush1.bf16.msra.mxu0 0
        %1106 = vmatprep.subr.bf16.mxu0 0
        %1107 = vmatpush1.bf16.msra.mxu0 0
        %1108 = vmatprep.subr.bf16.mxu0 0
        %1109 = vmatpush1.bf16.msra.mxu0 0
        %1110 = vmatprep.mubr.bf16.mxu0 0
        %1111 = vmatmul.mubr.bf16.gmra.mrb[0].mxu0 %v1072
        %v1112 = vpop.f32.mrb[0].mxu0
        %v1113 = vadd.f32 0.0, %v1112
        %v1114 = vpop.f32.mrb[0].mxu0
        %v1115 = vpop.f32.mrb[0].mxu0
        %v1116 = vpop.f32.mrb[0].mxu0
        %1117 = vdwg.mxu0
        %1118 = vrot.lane.b32.xlu0 %v821, 64
        %v1119 = vpop.permute.xlu0 %1118
        %v1121 = vsel %vm827, %v1066, 0
        %v1124 = vsel %vm1074, %v1119, 0
        %1126 = vmatprep.subr.bf16.mxu0 0
        %1127 = vmatpush1.bf16.msra.mxu0 %v1124
        %1128 = vmatprep.subr.bf16.mxu0 0
        %1129 = vmatpush1.bf16.msra.mxu0 0
        %1130 = vmatprep.subr.bf16.mxu0 0
        %1131 = vmatpush1.bf16.msra.mxu0 0
        %1132 = vmatprep.subr.bf16.mxu0 0
        %1133 = vmatpush1.bf16.msra.mxu0 0
        %1134 = vmatprep.subr.bf16.mxu0 0
        %1135 = vmatpush1.bf16.msra.mxu0 0
        %1136 = vmatprep.subr.bf16.mxu0 0
        %1137 = vmatpush1.bf16.msra.mxu0 0
        %1138 = vmatprep.subr.bf16.mxu0 0
        %1139 = vmatpush1.bf16.msra.mxu0 0
        %1140 = vmatprep.subr.bf16.mxu0 0
        %1141 = vmatpush1.bf16.msra.mxu0 0
        %1142 = vmatprep.subr.bf16.mxu0 0
        %1143 = vmatpush1.bf16.msra.mxu0 0
        %1144 = vmatprep.subr.bf16.mxu0 0
        %1145 = vmatpush1.bf16.msra.mxu0 0
        %1146 = vmatprep.subr.bf16.mxu0 0
        %1147 = vmatpush1.bf16.msra.mxu0 0
        %1148 = vmatprep.subr.bf16.mxu0 0
        %1149 = vmatpush1.bf16.msra.mxu0 0
        %1150 = vmatprep.subr.bf16.mxu0 0
        %1151 = vmatpush1.bf16.msra.mxu0 0
        %1152 = vmatprep.subr.bf16.mxu0 0
        %1153 = vmatpush1.bf16.msra.mxu0 0
        %1154 = vmatprep.subr.bf16.mxu0 0
        %1155 = vmatpush1.bf16.msra.mxu0 0
        %1156 = vmatprep.subr.bf16.mxu0 0
        %1157 = vmatpush1.bf16.msra.mxu0 0
        %1158 = vmatprep.mubr.bf16.mxu0 0
        %1159 = vmatmul.mubr.bf16.gmra.mrb[0].mxu0 %v1121
        %v1160 = vpop.f32.mrb[0].mxu0
        %v1161 = vadd.f32 0.0, %v1160
        %v1162 = vpop.f32.mrb[0].mxu0
        %v1163 = vpop.f32.mrb[0].mxu0
        %v1164 = vpop.f32.mrb[0].mxu0
        %1165 = vdwg.mxu0
        %1166 = vrot.lane.b32.xlu0 %v822, 64
        %v1167 = vpop.permute.xlu0 %1166
        %v1169 = vsel %vm827, %v1067, 0
        %v1172 = vsel %vm1074, %v1167, 0
        %1174 = vmatprep.subr.bf16.mxu0 0
        %1175 = vmatpush1.bf16.msra.mxu0 %v1172
        %1176 = vmatprep.subr.bf16.mxu0 0
        %1177 = vmatpush1.bf16.msra.mxu0 0
        %1178 = vmatprep.subr.bf16.mxu0 0
        %1179 = vmatpush1.bf16.msra.mxu0 0
        %1180 = vmatprep.subr.bf16.mxu0 0
        %1181 = vmatpush1.bf16.msra.mxu0 0
        %1182 = vmatprep.subr.bf16.mxu0 0
        %1183 = vmatpush1.bf16.msra.mxu0 0
        %1184 = vmatprep.subr.bf16.mxu0 0
        %1185 = vmatpush1.bf16.msra.mxu0 0
        %1186 = vmatprep.subr.bf16.mxu0 0
        %1187 = vmatpush1.bf16.msra.mxu0 0
        %1188 = vmatprep.subr.bf16.mxu0 0
        %1189 = vmatpush1.bf16.msra.mxu0 0
        %1190 = vmatprep.subr.bf16.mxu0 0
        %1191 = vmatpush1.bf16.msra.mxu0 0
        %1192 = vmatprep.subr.bf16.mxu0 0
        %1193 = vmatpush1.bf16.msra.mxu0 0
        %1194 = vmatprep.subr.bf16.mxu0 0
        %1195 = vmatpush1.bf16.msra.mxu0 0
        %1196 = vmatprep.subr.bf16.mxu0 0
        %1197 = vmatpush1.bf16.msra.mxu0 0
        %1198 = vmatprep.subr.bf16.mxu0 0
        %1199 = vmatpush1.bf16.msra.mxu0 0
        %1200 = vmatprep.subr.bf16.mxu0 0
        %1201 = vmatpush1.bf16.msra.mxu0 0
        %1202 = vmatprep.subr.bf16.mxu0 0
        %1203 = vmatpush1.bf16.msra.mxu0 0
        %1204 = vmatprep.subr.bf16.mxu0 0
        %1205 = vmatpush1.bf16.msra.mxu0 0
        %1206 = vmatprep.mubr.bf16.mxu0 0
        %1207 = vmatmul.mubr.bf16.gmra.mrb[0].mxu0 %v1169
        %v1208 = vpop.f32.mrb[0].mxu0
        %v1209 = vadd.f32 0.0, %v1208
        %v1210 = vpop.f32.mrb[0].mxu0
        %v1211 = vpop.f32.mrb[0].mxu0
        %v1212 = vpop.f32.mrb[0].mxu0
        %1213 = vdwg.mxu0
        %1214 = vrot.lane.b32.xlu0 %v823, 64
        %v1215 = vpop.permute.xlu0 %1214
        %v1217 = vsel %vm827, %v1068, 0
        %v1220 = vsel %vm1074, %v1215, 0
        %1222 = vmatprep.subr.bf16.mxu0 0
        %1223 = vmatpush1.bf16.msra.mxu0 %v1220
        %1224 = vmatprep.subr.bf16.mxu0 0
        %1225 = vmatpush1.bf16.msra.mxu0 0
        %1226 = vmatprep.subr.bf16.mxu0 0
        %1227 = vmatpush1.bf16.msra.mxu0 0
        %1228 = vmatprep.subr.bf16.mxu0 0
        %1229 = vmatpush1.bf16.msra.mxu0 0
        %1230 = vmatprep.subr.bf16.mxu0 0
        %1231 = vmatpush1.bf16.msra.mxu0 0
        %1232 = vmatprep.subr.bf16.mxu0 0
        %1233 = vmatpush1.bf16.msra.mxu0 0
        %1234 = vmatprep.subr.bf16.mxu0 0
        %1235 = vmatpush1.bf16.msra.mxu0 0
        %1236 = vmatprep.subr.bf16.mxu0 0
        %1237 = vmatpush1.bf16.msra.mxu0 0
        %1238 = vmatprep.subr.bf16.mxu0 0
        %1239 = vmatpush1.bf16.msra.mxu0 0
        %1240 = vmatprep.subr.bf16.mxu0 0
        %1241 = vmatpush1.bf16.msra.mxu0 0
        %1242 = vmatprep.subr.bf16.mxu0 0
        %1243 = vmatpush1.bf16.msra.mxu0 0
        %1244 = vmatprep.subr.bf16.mxu0 0
        %1245 = vmatpush1.bf16.msra.mxu0 0
        %1246 = vmatprep.subr.bf16.mxu0 0
        %1247 = vmatpush1.bf16.msra.mxu0 0
        %1248 = vmatprep.subr.bf16.mxu0 0
        %1249 = vmatpush1.bf16.msra.mxu0 0
        %1250 = vmatprep.subr.bf16.mxu0 0
        %1251 = vmatpush1.bf16.msra.mxu0 0
        %1252 = vmatprep.subr.bf16.mxu0 0
        %1253 = vmatpush1.bf16.msra.mxu0 0
        %1254 = vmatprep.mubr.bf16.mxu0 0
        %1255 = vmatmul.mubr.bf16.gmra.mrb[0].mxu0 %v1217
        %v1256 = vpop.f32.mrb[0].mxu0
        %v1257 = vadd.f32 0.0, %v1256
        %v1258 = vpop.f32.mrb[0].mxu0
        %v1259 = vpop.f32.mrb[0].mxu0
        %v1260 = vpop.f32.mrb[0].mxu0
        %1261 = vdwg.mxu0
        %v1262 = vpack.c.bf16 %v1113, %v1113
        %v1263 = vpack.c.bf16 %v1161, %v1161
        %v1264 = vpack.c.bf16 %v1209, %v1209
        %v1265 = vpack.c.bf16 %v1257, %v1257
        %v1266 = vld [vmem:[%s713] sm:$0xf]
        %v1267 = vld [vmem:[%s713 + $0x4] sm:$0xf]
        %v1268 = vld [vmem:[%s713 + $0x8] sm:$0xf]
        %v1269 = vld [vmem:[%s713 + $0xc] sm:$0xf]
        %v1271 = vsel %vm827, %v1262, 0
        %v1274 = vsel %vm1074, %v1266, 0
        %1276 = vmatprep.subr.bf16.mxu0 0
        %1277 = vmatpush1.bf16.msra.mxu0 %v1274
        %1278 = vmatprep.subr.bf16.mxu0 0
        %1279 = vmatpush1.bf16.msra.mxu0 0
        %1280 = vmatprep.subr.bf16.mxu0 0
        %1281 = vmatpush1.bf16.msra.mxu0 0
        %1282 = vmatprep.subr.bf16.mxu0 0
        %1283 = vmatpush1.bf16.msra.mxu0 0
        %1284 = vmatprep.subr.bf16.mxu0 0
        %1285 = vmatpush1.bf16.msra.mxu0 0
        %1286 = vmatprep.subr.bf16.mxu0 0
        %1287 = vmatpush1.bf16.msra.mxu0 0
        %1288 = vmatprep.subr.bf16.mxu0 0
        %1289 = vmatpush1.bf16.msra.mxu0 0
        %1290 = vmatprep.subr.bf16.mxu0 0
        %1291 = vmatpush1.bf16.msra.mxu0 0
        %1292 = vmatprep.subr.bf16.mxu0 0
        %1293 = vmatpush1.bf16.msra.mxu0 0
        %1294 = vmatprep.subr.bf16.mxu0 0
        %1295 = vmatpush1.bf16.msra.mxu0 0
        %1296 = vmatprep.subr.bf16.mxu0 0
        %1297 = vmatpush1.bf16.msra.mxu0 0
        %1298 = vmatprep.subr.bf16.mxu0 0
        %1299 = vmatpush1.bf16.msra.mxu0 0
        %1300 = vmatprep.subr.bf16.mxu0 0
        %1301 = vmatpush1.bf16.msra.mxu0 0
        %1302 = vmatprep.subr.bf16.mxu0 0
        %1303 = vmatpush1.bf16.msra.mxu0 0
        %1304 = vmatprep.subr.bf16.mxu0 0
        %1305 = vmatpush1.bf16.msra.mxu0 0
        %1306 = vmatprep.subr.bf16.mxu0 0
        %1307 = vmatpush1.bf16.msra.mxu0 0
        %1308 = vmatprep.mubr.bf16.mxu0 0
        %1309 = vmatmul.mubr.bf16.gmra.mrb[0].mxu0 %v1271
        %v1310 = vpop.f32.mrb[0].mxu0
        %v1311 = vadd.f32 0.0, %v1310
        %v1312 = vpop.f32.mrb[0].mxu0
        %v1313 = vpop.f32.mrb[0].mxu0
        %v1314 = vpop.f32.mrb[0].mxu0
        %1315 = vdwg.mxu0
        %v1317 = vsel %vm827, %v1263, 0
        %v1320 = vsel %vm1074, %v1267, 0
        %1322 = vmatprep.subr.bf16.mxu0 0
        %1323 = vmatpush1.bf16.msra.mxu0 %v1320
        %1324 = vmatprep.subr.bf16.mxu0 0
        %1325 = vmatpush1.bf16.msra.mxu0 0
        %1326 = vmatprep.subr.bf16.mxu0 0
        %1327 = vmatpush1.bf16.msra.mxu0 0
        %1328 = vmatprep.subr.bf16.mxu0 0
        %1329 = vmatpush1.bf16.msra.mxu0 0
        %1330 = vmatprep.subr.bf16.mxu0 0
        %1331 = vmatpush1.bf16.msra.mxu0 0
        %1332 = vmatprep.subr.bf16.mxu0 0
        %1333 = vmatpush1.bf16.msra.mxu0 0
        %1334 = vmatprep.subr.bf16.mxu0 0
        %1335 = vmatpush1.bf16.msra.mxu0 0
        %1336 = vmatprep.subr.bf16.mxu0 0
        %1337 = vmatpush1.bf16.msra.mxu0 0
        %1338 = vmatprep.subr.bf16.mxu0 0
        %1339 = vmatpush1.bf16.msra.mxu0 0
        %1340 = vmatprep.subr.bf16.mxu0 0
        %1341 = vmatpush1.bf16.msra.mxu0 0
        %1342 = vmatprep.subr.bf16.mxu0 0
        %1343 = vmatpush1.bf16.msra.mxu0 0
        %1344 = vmatprep.subr.bf16.mxu0 0
        %1345 = vmatpush1.bf16.msra.mxu0 0
        %1346 = vmatprep.subr.bf16.mxu0 0
        %1347 = vmatpush1.bf16.msra.mxu0 0
        %1348 = vmatprep.subr.bf16.mxu0 0
        %1349 = vmatpush1.bf16.msra.mxu0 0
        %1350 = vmatprep.subr.bf16.mxu0 0
        %1351 = vmatpush1.bf16.msra.mxu0 0
        %1352 = vmatprep.subr.bf16.mxu0 0
        %1353 = vmatpush1.bf16.msra.mxu0 0
        %1354 = vmatprep.mubr.bf16.mxu0 0
        %1355 = vmatmul.mubr.bf16.gmra.mrb[0].mxu0 %v1317
        %v1356 = vpop.f32.mrb[0].mxu0
        %v1357 = vadd.f32 0.0, %v1356
        %v1358 = vpop.f32.mrb[0].mxu0
        %v1359 = vpop.f32.mrb[0].mxu0
        %v1360 = vpop.f32.mrb[0].mxu0
        %1361 = vdwg.mxu0
        %v1363 = vsel %vm827, %v1264, 0
        %v1366 = vsel %vm1074, %v1268, 0
        %1368 = vmatprep.subr.bf16.mxu0 0
        %1369 = vmatpush1.bf16.msra.mxu0 %v1366
        %1370 = vmatprep.subr.bf16.mxu0 0
        %1371 = vmatpush1.bf16.msra.mxu0 0
        %1372 = vmatprep.subr.bf16.mxu0 0
        %1373 = vmatpush1.bf16.msra.mxu0 0
        %1374 = vmatprep.subr.bf16.mxu0 0
        %1375 = vmatpush1.bf16.msra.mxu0 0
        %1376 = vmatprep.subr.bf16.mxu0 0
        %1377 = vmatpush1.bf16.msra.mxu0 0
        %1378 = vmatprep.subr.bf16.mxu0 0
        %1379 = vmatpush1.bf16.msra.mxu0 0
        %1380 = vmatprep.subr.bf16.mxu0 0
        %1381 = vmatpush1.bf16.msra.mxu0 0
        %1382 = vmatprep.subr.bf16.mxu0 0
        %1383 = vmatpush1.bf16.msra.mxu0 0
        %1384 = vmatprep.subr.bf16.mxu0 0
        %1385 = vmatpush1.bf16.msra.mxu0 0
        %1386 = vmatprep.subr.bf16.mxu0 0
        %1387 = vmatpush1.bf16.msra.mxu0 0
        %1388 = vmatprep.subr.bf16.mxu0 0
        %1389 = vmatpush1.bf16.msra.mxu0 0
        %1390 = vmatprep.subr.bf16.mxu0 0
        %1391 = vmatpush1.bf16.msra.mxu0 0
        %1392 = vmatprep.subr.bf16.mxu0 0
        %1393 = vmatpush1.bf16.msra.mxu0 0
        %1394 = vmatprep.subr.bf16.mxu0 0
        %1395 = vmatpush1.bf16.msra.mxu0 0
        %1396 = vmatprep.subr.bf16.mxu0 0
        %1397 = vmatpush1.bf16.msra.mxu0 0
        %1398 = vmatprep.subr.bf16.mxu0 0
        %1399 = vmatpush1.bf16.msra.mxu0 0
        %1400 = vmatprep.mubr.bf16.mxu0 0
        %1401 = vmatmul.mubr.bf16.gmra.mrb[0].mxu0 %v1363
        %v1402 = vpop.f32.mrb[0].mxu0
        %v1403 = vadd.f32 0.0, %v1402
        %v1404 = vpop.f32.mrb[0].mxu0
        %v1405 = vpop.f32.mrb[0].mxu0
        %v1406 = vpop.f32.mrb[0].mxu0
        %1407 = vdwg.mxu0
        %v1409 = vsel %vm827, %v1265, 0
        %v1412 = vsel %vm1074, %v1269, 0
        %1414 = vmatprep.subr.bf16.mxu0 0
        %1415 = vmatpush1.bf16.msra.mxu0 %v1412
        %1416 = vmatprep.subr.bf16.mxu0 0
        %1417 = vmatpush1.bf16.msra.mxu0 0
        %1418 = vmatprep.subr.bf16.mxu0 0
        %1419 = vmatpush1.bf16.msra.mxu0 0
        %1420 = vmatprep.subr.bf16.mxu0 0
        %1421 = vmatpush1.bf16.msra.mxu0 0
        %1422 = vmatprep.subr.bf16.mxu0 0
        %1423 = vmatpush1.bf16.msra.mxu0 0
        %1424 = vmatprep.subr.bf16.mxu0 0
        %1425 = vmatpush1.bf16.msra.mxu0 0
        %1426 = vmatprep.subr.bf16.mxu0 0
        %1427 = vmatpush1.bf16.msra.mxu0 0
        %1428 = vmatprep.subr.bf16.mxu0 0
        %1429 = vmatpush1.bf16.msra.mxu0 0
        %1430 = vmatprep.subr.bf16.mxu0 0
        %1431 = vmatpush1.bf16.msra.mxu0 0
        %1432 = vmatprep.subr.bf16.mxu0 0
        %1433 = vmatpush1.bf16.msra.mxu0 0
        %1434 = vmatprep.subr.bf16.mxu0 0
        %1435 = vmatpush1.bf16.msra.mxu0 0
        %1436 = vmatprep.subr.bf16.mxu0 0
        %1437 = vmatpush1.bf16.msra.mxu0 0
        %1438 = vmatprep.subr.bf16.mxu0 0
        %1439 = vmatpush1.bf16.msra.mxu0 0
        %1440 = vmatprep.subr.bf16.mxu0 0
        %1441 = vmatpush1.bf16.msra.mxu0 0
        %1442 = vmatprep.subr.bf16.mxu0 0
        %1443 = vmatpush1.bf16.msra.mxu0 0
        %1444 = vmatprep.subr.bf16.mxu0 0
        %1445 = vmatpush1.bf16.msra.mxu0 0
        %1446 = vmatprep.mubr.bf16.mxu0 0
        %1447 = vmatmul.mubr.bf16.gmra.mrb[0].mxu0 %v1409
        %v1448 = vpop.f32.mrb[0].mxu0
        %v1449 = vadd.f32 0.0, %v1448
        %v1450 = vpop.f32.mrb[0].mxu0
        %v1451 = vpop.f32.mrb[0].mxu0
        %v1452 = vpop.f32.mrb[0].mxu0
        %1453 = vdwg.mxu0
        %v1454 = vsel %vm766, %v1311, 0.0
        %v1455 = vsel %vm766, %v1357, 0.0
        %v1456 = vadd.f32 %v1454, %v1455
        %v1457 = vsel %vm766, %v1403, 0.0
        %v1458 = vadd.f32 %v1456, %v1457
        %v1459 = vsel %vm766, %v1449, 0.0
        %v1460 = vadd.f32 %v1458, %v1459
        %v1461 = vld [vmem:[%s587] sm:$0x1]
        %v1463 = vlaneseq
        %v1464 = vshrl.u32 %v1463, 7
        %v1465 = vsub.s32 0, %v1464
        %v1466 = vrot.slane %v1461, %v1465
        %v1468 = vadd.f32 %v1460, %v1466
        %v1469 = vadd.f32 %v741, %v1468
        %v1470 = vld [vmem:[%s595] sm:$0x1]
        %v1471 = vld [vmem:[%s603] sm:$0x1]
        %v1472 = vsel %vm766, %v1469, 0.0
        %1473 = vadd.xlane.f32.xlu0 %v1472
        %v1474 = vpop.xlane.xlu0 %1473
        %v1475 = vrcp.pop 32.0
        %v1476 = vmul.f32 %v1474, %v1475
        %v1477 = vsub.f32 %v1469, %v1476
        %v1478 = vmul.f32 %v1477, %v1477
        %v1479 = vsel %vm766, %v1478, 0.0
        %1480 = vadd.xlane.f32.xlu0 %v1479
        %v1481 = vpop.xlane.xlu0 %1480
        %v1482 = vmul.f32 %v1481, %v1475
        %v1483 = vadd.f32 %v1482, 1e-12
        %v1484 = vrsqrt.pop %v1483
        %v1485 = vmul.f32 %v1477, %v1484
        %v1487 = vlaneseq
        %v1488 = vshrl.u32 %v1487, 7
        %v1489 = vsub.s32 0, %v1488
        %v1490 = vrot.slane %v1470, %v1489
        %v1492 = vmul.f32 %v1485, %v1490
        %v1494 = vlaneseq
        %v1495 = vshrl.u32 %v1494, 7
        %v1496 = vsub.s32 0, %v1495
        %v1497 = vrot.slane %v1471, %v1496
        %v1499 = vadd.f32 %v1492, %v1497
        %v1500 = vld [vmem:[%s718] sm:$0xf]
        %v1501 = vld [vmem:[%s718 + $0x4] sm:$0xf]
        %v1502 = vld [vmem:[%s718 + $0x8] sm:$0xf]
        %v1503 = vld [vmem:[%s718 + $0xc] sm:$0xf]
        %v1504 = vpack.c.bf16 %v1499, %v1499
        %v1505 = vld [vmem:[%s611] sm:$0x1]
        %v1507 = vlaneseq
        %v1508 = vshrl.u32 %v1507, 7
        %v1509 = vsub.s32 0, %v1508
        %v1510 = vrot.slane %v1505, %v1509
        %v1516 = vunpack.c.l.b16 %v1500
        %v1517 = vunpack.c.l.b16 %v1501
        %v1518 = vunpack.c.l.b16 %v1502
        %v1519 = vunpack.c.l.b16 %v1503
        %v1520 = vpack.c.b16 %v1517, %v1516
        %v1521 = vpack.c.b16 %v1519, %v1518
        %v1525 = vsel %vm766, %v1504, 0
        %1527 = vmatprep.subr.bf16.mxu0 0
        %1528 = vmatpush1.bf16.msra.mxu0 %v1520
        %1529 = vmatprep.subr.bf16.mxu0 0
        %1530 = vmatpush1.bf16.msra.mxu0 %v1521
        %1531 = vmatprep.subr.bf16.mxu0 0
        %1532 = vmatpush1.bf16.msra.mxu0 0
        %1533 = vmatprep.subr.bf16.mxu0 0
        %1534 = vmatpush1.bf16.msra.mxu0 0
        %1535 = vmatprep.subr.bf16.mxu0 0
        %1536 = vmatpush1.bf16.msra.mxu0 0
        %1537 = vmatprep.subr.bf16.mxu0 0
        %1538 = vmatpush1.bf16.msra.mxu0 0
        %1539 = vmatprep.subr.bf16.mxu0 0
        %1540 = vmatpush1.bf16.msra.mxu0 0
        %1541 = vmatprep.subr.bf16.mxu0 0
        %1542 = vmatpush1.bf16.msra.mxu0 0
        %1543 = vmatprep.subr.bf16.mxu0 0
        %1544 = vmatpush1.bf16.msra.mxu0 0
        %1545 = vmatprep.subr.bf16.mxu0 0
        %1546 = vmatpush1.bf16.msra.mxu0 0
        %1547 = vmatprep.subr.bf16.mxu0 0
        %1548 = vmatpush1.bf16.msra.mxu0 0
        %1549 = vmatprep.subr.bf16.mxu0 0
        %1550 = vmatpush1.bf16.msra.mxu0 0
        %1551 = vmatprep.subr.bf16.mxu0 0
        %1552 = vmatpush1.bf16.msra.mxu0 0
        %1553 = vmatprep.subr.bf16.mxu0 0
        %1554 = vmatpush1.bf16.msra.mxu0 0
        %1555 = vmatprep.subr.bf16.mxu0 0
        %1556 = vmatpush1.bf16.msra.mxu0 0
        %1557 = vmatprep.subr.bf16.mxu0 0
        %1558 = vmatpush1.bf16.msra.mxu0 0
        %1559 = vmatprep.mubr.bf16.mxu0 0
        %1560 = vmatmul.mubr.bf16.gmra.mrb[0].mxu0 %v1525
        %v1561 = vpop.f32.mrb[0].mxu0
        %v1562 = vadd.f32 %v1510, %v1561
        %v1563 = vpop.f32.mrb[0].mxu0
        %v1564 = vpop.f32.mrb[0].mxu0
        %v1565 = vpop.f32.mrb[0].mxu0
        %1566 = vdwg.mxu0
        %v1567 = vmul.f32 %v1562, 0.5
        %v1568 = vmul.f32 %v1562, 0.044715
        %v1569 = vmul.f32 %v1568, %v1562
        %v1570 = vmul.f32 %v1569, %v1562
        %v1571 = vadd.f32 %v1562, %v1570
        %v1572 = vmul.f32 %v1571, 0.7978846
        %v1573 = vtanh.pop %v1572
        %v1574 = vadd.f32 %v1573, 1.0
        %v1575 = vmul.f32 %v1567, %v1574
        %v1576 = vld [vmem:[%s723] sm:$0xf]
        %v1577 = vld [vmem:[%s723 + $0x4] sm:$0xf]
        %v1578 = vld [vmem:[%s723 + $0x8] sm:$0xf]
        %v1579 = vld [vmem:[%s723 + $0xc] sm:$0xf]
        %v1580 = vld [vmem:[%s723 + $0x10] sm:$0xf]
        %v1581 = vld [vmem:[%s723 + $0x14] sm:$0xf]
        %v1582 = vld [vmem:[%s723 + $0x18] sm:$0xf]
        %v1583 = vld [vmem:[%s723 + $0x1c] sm:$0xf]
        %v1584 = vpack.c.bf16 %v1575, %v1575
        %v1585 = vld [vmem:[%s726] sm:$0x1]
        %v1587 = vlaneseq
        %v1588 = vshrl.u32 %v1587, 7
        %v1589 = vsub.s32 0, %v1588
        %v1590 = vrot.slane %v1585, %v1589
        %v1600 = vunpack.c.l.b16 %v1576
        %v1601 = vunpack.c.l.b16 %v1577
        %v1602 = vunpack.c.l.b16 %v1578
        %v1603 = vunpack.c.l.b16 %v1579
        %v1604 = vunpack.c.l.b16 %v1580
        %v1605 = vunpack.c.l.b16 %v1581
        %v1606 = vunpack.c.l.b16 %v1582
        %v1607 = vunpack.c.l.b16 %v1583
        %v1608 = vpack.c.b16 %v1601, %v1600
        %v1609 = vpack.c.b16 %v1603, %v1602
        %v1610 = vpack.c.b16 %v1605, %v1604
        %v1611 = vpack.c.b16 %v1607, %v1606
        %vm1616 = vcmask 523264
        %v1618 = vsel %vm1616, %v1584, 0
        %1620 = vmatprep.subr.bf16.mxu0 0
        %1621 = vmatpush1.bf16.msra.mxu0 %v1608
        %1622 = vmatprep.subr.bf16.mxu0 0
        %1623 = vmatpush1.bf16.msra.mxu0 %v1609
        %1624 = vmatprep.subr.bf16.mxu0 0
        %1625 = vmatpush1.bf16.msra.mxu0 %v1610
        %1626 = vmatprep.subr.bf16.mxu0 0
        %1627 = vmatpush1.bf16.msra.mxu0 %v1611
        %1628 = vmatprep.subr.bf16.mxu0 0
        %1629 = vmatpush1.bf16.msra.mxu0 0
        %1630 = vmatprep.subr.bf16.mxu0 0
        %1631 = vmatpush1.bf16.msra.mxu0 0
        %1632 = vmatprep.subr.bf16.mxu0 0
        %1633 = vmatpush1.bf16.msra.mxu0 0
        %1634 = vmatprep.subr.bf16.mxu0 0
        %1635 = vmatpush1.bf16.msra.mxu0 0
        %1636 = vmatprep.subr.bf16.mxu0 0
        %1637 = vmatpush1.bf16.msra.mxu0 0
        %1638 = vmatprep.subr.bf16.mxu0 0
        %1639 = vmatpush1.bf16.msra.mxu0 0
        %1640 = vmatprep.subr.bf16.mxu0 0
        %1641 = vmatpush1.bf16.msra.mxu0 0
        %1642 = vmatprep.subr.bf16.mxu0 0
        %1643 = vmatpush1.bf16.msra.mxu0 0
        %1644 = vmatprep.subr.bf16.mxu0 0
        %1645 = vmatpush1.bf16.msra.mxu0 0
        %1646 = vmatprep.subr.bf16.mxu0 0
        %1647 = vmatpush1.bf16.msra.mxu0 0
        %1648 = vmatprep.subr.bf16.mxu0 0
        %1649 = vmatpush1.bf16.msra.mxu0 0
        %1650 = vmatprep.subr.bf16.mxu0 0
        %1651 = vmatpush1.bf16.msra.mxu0 0
        %1652 = vmatprep.mubr.bf16.mxu0 0
        %1653 = vmatmul.mubr.bf16.gmra.mrb[0].mxu0 %v1618
        %v1654 = vpop.f32.mrb[0].mxu0
        %v1655 = vadd.f32 %v1590, %v1654
        %v1656 = vpop.f32.mrb[0].mxu0
        %v1657 = vpop.f32.mrb[0].mxu0
        %v1658 = vpop.f32.mrb[0].mxu0
        %1659 = vdwg.mxu0
        %v1660 = vadd.f32 %v1499, %v1655
        %v1661 = vld [vmem:[%s729] sm:$0x1]
        %v1662 = vld [vmem:[%s732] sm:$0x1]
        %v1663 = vsel %vm766, %v1660, 0.0
        %1664 = vadd.xlane.f32.xlu0 %v1663
        %v1665 = vpop.xlane.xlu0 %1664
        %v1666 = vmul.f32 %v1665, %v1475
        %v1667 = vsub.f32 %v1660, %v1666
        %v1668 = vmul.f32 %v1667, %v1667
        %v1669 = vsel %vm766, %v1668, 0.0
        %1670 = vadd.xlane.f32.xlu0 %v1669
        %v1671 = vpop.xlane.xlu0 %1670
        %v1672 = vmul.f32 %v1671, %v1475
        %v1673 = vadd.f32 %v1672, 1e-12
        %v1674 = vrsqrt.pop %v1673
        %v1675 = vmul.f32 %v1667, %v1674
        %v1677 = vlaneseq
        %v1678 = vshrl.u32 %v1677, 7
        %v1679 = vsub.s32 0, %v1678
        %v1680 = vrot.slane %v1661, %v1679
        %v1682 = vmul.f32 %v1675, %v1680
        %v1684 = vlaneseq
        %v1685 = vshrl.u32 %v1684, 7
        %v1686 = vsub.s32 0, %v1685
        %v1687 = vrot.slane %v1662, %v1686
        %v1689 = vadd.f32 %v1682, %v1687
        %1690 = vst.msk [vmem:[#allocation2] sm:$0xff] %vm766, %v1689
        %p1691 = scmp.eq.s32.totalorder %s41, 1
        // Predicated region
        $region97: #{tpu_custom_call.1} parent=71 // pred_check
          %p1692 = pneg %p1691
        $region98: #{tpu_custom_call.1} parent=71 // pred_check_branch
          %1694 = sbr.rel (%p1692) target = $region100
        $region99: #{tpu_custom_call.1} parent=71 // pred_region
          %vm1695 = vcmask 253952
          %1696 = vst.msk [vmem:[%s700] sm:$0x1] %vm1695, %v1689
        $region100: #{tpu_custom_call.1} parent=71 // pred_fallthru
          _
        %s1697 = sand.u32 %s394, 1
        %s1698 = scalar_lea.sflag [#allocation5], %s1697
        %s1699 = sand.u32 %s394, 1
        %s1700 = scalar_lea.vmem [#allocation12], %s1699
        // Predicated region
        $region101: #{tpu_custom_call.1} parent=71 // pred_check
          %p1701 = pneg %p404
        $region102: #{tpu_custom_call.1} parent=71 // pred_check_branch
          %1703 = sbr.rel (%p1701) target = $region104
        $region103: #{tpu_custom_call.1} parent=71 // pred_region
          %s1705 = ssub.s32 16, 16
          %1706 = vsyncadd %s1698, %s1705
          %s1707 = smul.addr %s40, 16
          %s1708 = scalar_lea.hbm %s13, %s1707
          %s1710 = sshll.u32 %s1700, 4
          %s1711 = int_to_ptr.vmem [resolvable:$true] %s1710
          %1713 = dma.vmem_to_hbm [thread:$0]  %s1711, 16, %s1708, %s1698
        $region104: #{tpu_custom_call.1} parent=71 // pred_fallthru
          _
      $region72: #{tpu_custom_call.1} parent=5 // pred_fallthru
        _
      %p1714 = scmp.le.s32.totalorder 2, %s31
      // Predicated region
      $region105: #{tpu_custom_call.1} parent=5 // pred_check
        %p1715 = pneg %p1714
      $region106: #{tpu_custom_call.1} parent=5 // pred_check_branch
        %1717 = sbr.rel (%p1715) target = $region108
      $region107: #{tpu_custom_call.1} parent=5 // pred_region
        %s1718 = ssub.s32 %s31, 2
        // Predicated region
        $region109: #{tpu_custom_call.1} parent=107 // pred_check
          %p1719 = pneg %p410
        $region110: #{tpu_custom_call.1} parent=107 // pred_check_branch
          %1721 = sbr.rel (%p1719) target = $region112
        $region111: #{tpu_custom_call.1} parent=107 // pred_region
          %s1722 = sand.u32 %s395, 1
          %s1723 = scalar_lea.sflag [#allocation5], %s1722
          %s1724 = sand.u32 %s395, 1
          %s1725 = scalar_lea.vmem [#allocation12], %s1724
          %1726 = dma.done %s1723, 16
        $region112: #{tpu_custom_call.1} parent=107 // pred_fallthru
          _
      $region108: #{tpu_custom_call.1} parent=5 // pred_fallthru
        _
    $region6: #{tpu_custom_call.1} parent=1 // loop_footer
      %s35 = sadd.s32 1, %s31
    $region7: #{tpu_custom_call.1} parent=1 // loop_footer_branch
      %30 = sbr.rel target = $region3
    $region8: #{tpu_custom_call.1} parent=1 // loop_exit
      _
    %1727 = vsyncpa [#allocation4], 1
    %s1728 = scalar_lea.sflag [#allocation4], 1
    %1729 = vsyncpa %s1728, 1
    %1730 = vsyncpa [#allocation7], 1
    %s1731 = scalar_lea.sflag [#allocation7], 1
    %1732 = vsyncpa %s1731, 1
    %1733 = vsyncpa [#allocation10], 1
    %s1734 = scalar_lea.sflag [#allocation10], 1
    %1735 = vsyncpa %s1734, 1
    %1736 = vsyncpa [#allocation5], 1
    %s1737 = scalar_lea.sflag [#allocation5], 1
    %1738 = vsyncpa %s1737, 1

</llo_original>
